<compile_context>
chip_gen: v6e
topology: v6e:2x2x1
jax: 0.10.0
libtpu: 0.0.40
codegen_flags: <defaults>
</compile_context>

<pallas_src>
import jax
import jax.numpy as jnp
from jax import lax
from jax.experimental import pallas as pl
from jax.experimental.pallas import tpu as pltpu

# ---- model hyper-parameters (small, consistent with the module structure) ----
B, S = 2, 8           # batch, sequence length
E = 32                # emb_size
H = 4                 # n_heads
K = E // H            # per-head dim
FF = 4 * E            # ff_hidden_mult * emb_size
V = 64                # vocab_size
VPAD = 128            # LM-head output padded to a full 128-lane slab
L = 2                 # n_layers
MAX_SEQ = 128
EPS = 1e-5            # nn.LayerNorm default eps
BS = B * S            # folded row count (queries)
HB = H * BS           # head-folded key/lane count
LANES = 128
# power-of-two shift constants for in-kernel index math
LOG_S = S.bit_length() - 1
LOG_K = K.bit_length() - 1
LOG_BS = BS.bit_length() - 1
assert (1 << LOG_S) == S and (1 << LOG_K) == K and (1 << LOG_BS) == BS
# dropout = 0.0 -> identity, omitted.


def _round8(n):
    return ((n + 7) // 8) * 8


# ---------------- static packed-weight layout (row offsets, all 8-aligned) ----------------
_GLOBAL_LAYOUT = [("tok_emb", V), ("pos", BS), ("wlm", E), ("blm", 1)]
_LAYER_LAYOUT = [("wqkv", E), ("wo", E), ("wf1", E), ("wf2T", E), ("vecs", 8)]
_VEC_ROW = {"bqkv": 0, "bo": 1, "g1": 2, "be1": 3, "g2": 4, "be2": 5, "bf1": 6, "bf2": 7}

_OFF = {}
_row = 0
for _name, _r in _GLOBAL_LAYOUT:
    _OFF[_name] = _row
    _row += _round8(_r)
_LOFF = []
for _l in range(L):
    _d = {}
    for _name, _r in _LAYER_LAYOUT:
        _d[_name] = _row
        _row += _round8(_r)
    _LOFF.append(_d)
TOTAL_ROWS = _row          # 392 rows x 128 lanes x f32 ~= 200 KB (single DMA, tiny vs VMEM)


def _layer_norm(x, gamma, beta):
    mean = jnp.mean(x, axis=-1, keepdims=True)
    var = jnp.mean((x - mean) ** 2, axis=-1, keepdims=True)   # biased variance (PyTorch LN)
    return (x - mean) * lax.rsqrt(var + EPS) * gamma + beta


def transformer_kernel(tok_ref, w_ref, out_ref):
    f32 = jnp.float32

    # ---- fused embedding lookup: one-hot (BS,V) @ tok_emb (V,E) + pre-tiled pos rows ----
    tok = tok_ref[...]                                               # (BS, 1) int32
    vocab_ids = lax.broadcasted_iota(jnp.int32, (BS, V), 1)
    onehot = (tok == vocab_ids).astype(f32)                          # (BS, V)
    tok_emb = w_ref[_OFF["tok_emb"]:_OFF["tok_emb"] + V, 0:E]        # (V, E)
    pos = w_ref[_OFF["pos"]:_OFF["pos"] + BS, 0:E]                   # (BS, E)
    x = jnp.dot(onehot, tok_emb, preferred_element_type=f32) + pos   # (BS, E)

    # ---- constants built once, outside the layer loop ----
    # additive causal + same-batch mask over the head-folded score layout (BS, H*BS)
    r_q = lax.broadcasted_iota(jnp.int32, (BS, HB), 0)               # query row  b*S+i
    col = lax.broadcasted_iota(jnp.int32, (BS, HB), 1)               # h*BS + key row
    c_k = col & (BS - 1)                                             # key row    b'*S+j
    ok = jnp.logical_and((c_k >> LOG_S) == (r_q >> LOG_S),           # same batch
                         (c_k & (S - 1)) <= (r_q & (S - 1)))         # causal j <= i
    bias = jnp.where(ok, 0.0, -1e30).astype(f32)                     # (BS, H*BS)

    # head-selector mask for K-hat / V-hat rows, (H*BS, E)
    hsel = ((lax.broadcasted_iota(jnp.int32, (HB, E), 0) >> LOG_BS) ==
            (lax.broadcasted_iota(jnp.int32, (HB, E), 1) >> LOG_K)).astype(f32)

    # block-diagonal ones for the per-head softmax denominator, (H*BS, H*BS)
    blockones = ((lax.broadcasted_iota(jnp.int32, (HB, HB), 0) >> LOG_BS) ==
                 (lax.broadcasted_iota(jnp.int32, (HB, HB), 1) >> LOG_BS)).astype(f32)

    scale = 1.0 / (K ** 0.5)

    for l in range(L):                       # static unroll over layers
        off = _LOFF[l]
        wqkv = w_ref[off["wqkv"]:off["wqkv"] + E, 0:3 * E]           # (E, 3E)
        wo = w_ref[off["wo"]:off["wo"] + E, 0:E]                     # (E, E)
        wf1 = w_ref[off["wf1"]:off["wf1"] + E, 0:FF]                 # (E, FF)
        wf2T = w_ref[off["wf2T"]:off["wf2T"] + E, 0:FF]              # (E, FF) == wf2.T
        vecs = w_ref[off["vecs"]:off["vecs"] + 8, :]                 # (8, 128) bias/LN rows
        bqkv = vecs[_VEC_ROW["bqkv"]:_VEC_ROW["bqkv"] + 1, 0:3 * E]
        bo = vecs[_VEC_ROW["bo"]:_VEC_ROW["bo"] + 1, 0:E]
        g1 = vecs[_VEC_ROW["g1"]:_VEC_ROW["g1"] + 1, 0:E]
        be1 = vecs[_VEC_ROW["be1"]:_VEC_ROW["be1"] + 1, 0:E]
        g2 = vecs[_VEC_ROW["g2"]:_VEC_ROW["g2"] + 1, 0:E]
        be2 = vecs[_VEC_ROW["be2"]:_VEC_ROW["be2"] + 1, 0:E]
        bf1 = vecs[_VEC_ROW["bf1"]:_VEC_ROW["bf1"] + 1, 0:FF]
        bf2 = vecs[_VEC_ROW["bf2"]:_VEC_ROW["bf2"] + 1, 0:E]

        # ---- fused QKV projection: one (BS,E)@(E,3E) matmul ----
        qkv = jnp.dot(x, wqkv, preferred_element_type=f32) + bqkv    # (BS, 3E)
        q = qkv[:, 0:E]
        k = qkv[:, E:2 * E]
        v = qkv[:, 2 * E:3 * E]

        # ---- fold heads into lanes: K-hat / V-hat rows index (head, key-row) pairs ----
        khat = jnp.tile(k, (H, 1)) * hsel                            # (H*BS, E)
        vhat = jnp.tile(v, (H, 1)) * hsel                            # (H*BS, E)

        # scores: one lane-dense contraction, plus precomputed additive mask
        s = jnp.einsum('qe,ce->qc', q, khat,
                       preferred_element_type=f32) * scale + bias    # (BS, H*BS)
        # per-row max is a valid shift for every head block (cancels in each block's softmax)
        m = jnp.max(s, axis=-1, keepdims=True)
        ex = jnp.exp(s - m)
        den = jnp.dot(ex, blockones, preferred_element_type=f32)     # per-head sums, broadcast
        probs = ex * pl.reciprocal(den, approx=True)                 # EUP reciprocal

        o = jnp.dot(probs, vhat, preferred_element_type=f32)         # (BS, E) = heads concat
        attn = jnp.dot(o, wo, preferred_element_type=f32) + bo

        # ---- residual + LN1 ----
        x = _layer_norm(attn + x, g1, be1)

        # ---- feed-forward ----
        ff = jnp.dot(x, wf1, preferred_element_type=f32) + bf1
        ff = jnp.maximum(ff, 0.0)
        ff = jnp.einsum('qf,ef->qe', ff, wf2T, preferred_element_type=f32) + bf2

        # ---- residual + LN2 ----
        x = _layer_norm(ff + x, g2, be2)

    # ---- LM head (padded to 128 lanes for an unmasked store) ----
    wlm = w_ref[_OFF["wlm"]:_OFF["wlm"] + E, :]                      # (E, 128)
    blm = w_ref[_OFF["blm"]:_OFF["blm"] + 1, :]                      # (1, 128)
    out_ref[...] = jnp.dot(x, wlm, preferred_element_type=f32) + blm


def pack_params(p):
    """One-time packing of every weight into a single lane-aligned (TOTAL_ROWS,128) buffer."""
    buf = jnp.zeros((TOTAL_ROWS, LANES), jnp.float32)

    def put(b, row, a):
        return lax.dynamic_update_slice(b, a.astype(jnp.float32), (row, 0))

    buf = put(buf, _OFF["tok_emb"], p["tok_emb"])
    buf = put(buf, _OFF["pos"], jnp.tile(p["pos_emb"][:S], (B, 1)))
    buf = put(buf, _OFF["wlm"], jnp.pad(p["wlm"], ((0, 0), (0, VPAD - V))))
    buf = put(buf, _OFF["blm"], jnp.pad(p["blm"], ((0, 0), (0, VPAD - V))))
    for l in range(L):
        off = _LOFF[l]
        buf = put(buf, off["wqkv"],
                  jnp.concatenate([p["wq"][l], p["wk"][l], p["wv"][l]], axis=-1))
        buf = put(buf, off["wo"], p["wo"][l])
        buf = put(buf, off["wf1"], p["wf1"][l])
        buf = put(buf, off["wf2T"], p["wf2"][l].T)
        vecs = jnp.zeros((8, LANES), jnp.float32)
        bqkv = jnp.concatenate([p["bq"][l], p["bk"][l], p["bv"][l]], axis=-1)
        for name, vec in (("bqkv", bqkv), ("bo", p["bo"][l]), ("g1", p["g1"][l]),
                          ("be1", p["be1"][l]), ("g2", p["g2"][l]), ("be2", p["be2"][l]),
                          ("bf1", p["bf1"][l]), ("bf2", p["bf2"][l])):
            vecs = lax.dynamic_update_slice(vecs, vec.astype(jnp.float32),
                                            (_VEC_ROW[name], 0))
        buf = put(buf, off["vecs"], vecs)
    return buf


@jax.jit
def transformer_forward(tokens, wbuf):
    tok2d = tokens.reshape(BS, 1).astype(jnp.int32)
    vmem = pl.BlockSpec(memory_space=pltpu.MemorySpace.VMEM)
    out = pl.pallas_call(
        transformer_kernel,
        out_shape=jax.ShapeDtypeStruct((BS, VPAD), jnp.float32),
        in_specs=[vmem, vmem],            # 2 operands -> 2 DMAs total (ids + packed weights)
        out_specs=vmem,
    )(tok2d, wbuf)
    return out[:, :V].reshape(B, S, V)


# -------------------- pure-JAX reference (for correctness check) --------------------
def reference_forward(tokens, p):
    x = p["tok_emb"][tokens] + p["pos_emb"][:S][None, :, :]
    causal = jnp.tril(jnp.ones((S, S), dtype=bool))
    for l in range(L):
        q = x @ p["wq"][l] + p["bq"][l]
        k = x @ p["wk"][l] + p["bk"][l]
        v = x @ p["wv"][l] + p["bv"][l]
        split = lambda t: t.reshape(B, S, H, K).transpose(0, 2, 1, 3)
        qh, kh, vh = split(q), split(k), split(v)
        s = jnp.einsum("bhqd,bhkd->bhqk", qh, kh) / (K ** 0.5)
        s = jnp.where(causal, s, -jnp.inf)
        w = jax.nn.softmax(s, axis=-1)
        o = jnp.einsum("bhqk,bhkd->bhqd", w, vh)
        o = o.transpose(0, 2, 1, 3).reshape(B, S, E)
        attn = o @ p["wo"][l] + p["bo"][l]
        x = _layer_norm(attn + x, p["g1"][l], p["be1"][l])
        ff = jax.nn.relu(x @ p["wf1"][l] + p["bf1"][l]) @ p["wf2"][l] + p["bf2"][l]
        x = _layer_norm(ff + x, p["g2"][l], p["be2"][l])
    return x @ p["wlm"] + p["blm"]


def make_params(key):
    ks = jax.random.split(key, 16)
    r = lambda k, shape, s=0.1: jax.random.normal(k, shape, jnp.float32) * s
    return {
        "tok_emb": r(ks[0], (V, E)),
        "pos_emb": r(ks[1], (MAX_SEQ, E)),
        "wq": r(ks[2], (L, E, E)),  "bq": r(ks[3], (L, 1, E), 0.02),
        "wk": r(ks[4], (L, E, E)),  "bk": r(ks[5], (L, 1, E), 0.02),
        "wv": r(ks[6], (L, E, E)),  "bv": r(ks[7], (L, 1, E), 0.02),
        "wo": r(ks[8], (L, E, E)),  "bo": r(ks[9], (L, 1, E), 0.02),
        "g1": jnp.ones((L, 1, E), jnp.float32),  "be1": jnp.zeros((L, 1, E), jnp.float32),
        "g2": jnp.ones((L, 1, E), jnp.float32),  "be2": jnp.zeros((L, 1, E), jnp.float32),
        "wf1": r(ks[10], (L, E, FF)), "bf1": r(ks[11], (L, 1, FF), 0.02),
        "wf2": r(ks[12], (L, FF, E)), "bf2": r(ks[13], (L, 1, E), 0.02),
        "wlm": r(ks[14], (E, V)),     "blm": r(ks[15], (1, V), 0.02),
    }


if __name__ == "__main__":
    root = jax.random.PRNGKey(0)
    k_params, k_tokens = jax.random.split(root)
    params = make_params(k_params)
    tokens = jax.random.randint(k_tokens, (B, S), 0, V, dtype=jnp.int32)

    # one-time packing, hoisted off the per-call path
    wbuf = jax.block_until_ready(pack_params(params))

    out = transformer_forward(tokens, wbuf)
    out = jax.block_until_ready(out)

    ref = jax.block_until_ready(reference_forward(tokens, params))
    assert out.shape == (B, S, V) and out.dtype == jnp.float32
    assert jnp.allclose(out, ref, atol=2e-3, rtol=2e-3), "Pallas output mismatch vs reference"

    print("KERNEL_OK")
</pallas_src>

<mosaic_0001>
module attributes {stable_mosaic.version = 11 : i64} {
  func.func @transformer_kernel(%arg0: memref<16x1xi32, #tpu.memory_space<vmem>>, %arg1: memref<392x128xf32, #tpu.memory_space<vmem>>, %arg2: memref<16x128xf32, #tpu.memory_space<vmem>>) attributes {dimension_semantics = [], scalar_prefetch = 0 : i64, scratch_operands = 0 : i64, tpu.core_type = #tpu.core_type<tc>} {
    %c0 = arith.constant 0 : index
    %c0_0 = arith.constant 0 : index
    %0 = vector.load %arg0[%c0, %c0_0] : memref<16x1xi32, #tpu.memory_space<vmem>>, vector<16x1xi32>
    %1 = tpu.iota {dimensions = array<i32: 1>} : vector<16x64xi32>
    %2 = vector.broadcast %0 : vector<16x1xi32> to vector<16x64xi32>
    %3 = arith.cmpi eq, %2, %1 : vector<16x64xi32>
    %4 = arith.extui %3 : vector<16x64xi1> to vector<16x64xi32>
    %5 = arith.sitofp %4 : vector<16x64xi32> to vector<16x64xf32>
    %c0_1 = arith.constant 0 : index
    %c0_2 = arith.constant 0 : index
    %6 = vector.load %arg1[%c0_1, %c0_2] : memref<392x128xf32, #tpu.memory_space<vmem>>, vector<64x32xf32>
    %c64 = arith.constant 64 : index
    %c0_3 = arith.constant 0 : index
    %7 = vector.load %arg1[%c64, %c0_3] : memref<392x128xf32, #tpu.memory_space<vmem>>, vector<16x32xf32>
    %cst = arith.constant dense<0.000000e+00> : vector<16x32xf32>
    %8 = tpu.matmul %5, %6, %cst {dimension_numbers = #tpu.dot_dimension_numbers<[1], [0], [0], [1], [0, 0, 1, 1], [], []>} : vector<16x64xf32>, vector<64x32xf32>, vector<16x32xf32> -> vector<16x32xf32>
    %9 = arith.addf %8, %7 : vector<16x32xf32>
    %10 = tpu.iota {dimensions = array<i32: 0>} : vector<16x64xi32>
    %11 = tpu.iota {dimensions = array<i32: 1>} : vector<16x64xi32>
    %c15_i32 = arith.constant 15 : i32
    %12 = vector.broadcast %c15_i32 : i32 to vector<16x64xi32>
    %13 = arith.andi %11, %12 : vector<16x64xi32>
    %c3_i32 = arith.constant 3 : i32
    %14 = vector.broadcast %c3_i32 : i32 to vector<16x64xi32>
    %15 = arith.shrsi %13, %14 : vector<16x64xi32>
    %c3_i32_4 = arith.constant 3 : i32
    %16 = vector.broadcast %c3_i32_4 : i32 to vector<16x64xi32>
    %17 = arith.shrsi %10, %16 : vector<16x64xi32>
    %18 = arith.cmpi eq, %15, %17 : vector<16x64xi32>
    %c7_i32 = arith.constant 7 : i32
    %19 = vector.broadcast %c7_i32 : i32 to vector<16x64xi32>
    %20 = arith.andi %13, %19 : vector<16x64xi32>
    %c7_i32_5 = arith.constant 7 : i32
    %21 = vector.broadcast %c7_i32_5 : i32 to vector<16x64xi32>
    %22 = arith.andi %10, %21 : vector<16x64xi32>
    %23 = arith.cmpi sle, %20, %22 : vector<16x64xi32>
    %24 = arith.andi %18, %23 : vector<16x64xi1>
    %cst_6 = arith.constant 0.000000e+00 : f32
    %cst_7 = arith.constant -1.000000e+30 : f32
    %25 = vector.broadcast %cst_6 : f32 to vector<16x64xf32>
    %26 = vector.broadcast %cst_7 : f32 to vector<16x64xf32>
    %27 = arith.select %24, %25, %26 : vector<16x64xi1>, vector<16x64xf32>
    %28 = tpu.iota {dimensions = array<i32: 0>} : vector<64x32xi32>
    %c4_i32 = arith.constant 4 : i32
    %29 = vector.broadcast %c4_i32 : i32 to vector<64x32xi32>
    %30 = arith.shrsi %28, %29 : vector<64x32xi32>
    %31 = tpu.iota {dimensions = array<i32: 1>} : vector<64x32xi32>
    %c3_i32_8 = arith.constant 3 : i32
    %32 = vector.broadcast %c3_i32_8 : i32 to vector<64x32xi32>
    %33 = arith.shrsi %31, %32 : vector<64x32xi32>
    %34 = arith.cmpi eq, %30, %33 : vector<64x32xi32>
    %35 = arith.extui %34 : vector<64x32xi1> to vector<64x32xi32>
    %36 = arith.sitofp %35 : vector<64x32xi32> to vector<64x32xf32>
    %37 = tpu.iota {dimensions = array<i32: 0>} : vector<64x64xi32>
    %c4_i32_9 = arith.constant 4 : i32
    %38 = vector.broadcast %c4_i32_9 : i32 to vector<64x64xi32>
    %39 = arith.shrsi %37, %38 : vector<64x64xi32>
    %40 = tpu.iota {dimensions = array<i32: 1>} : vector<64x64xi32>
    %c4_i32_10 = arith.constant 4 : i32
    %41 = vector.broadcast %c4_i32_10 : i32 to vector<64x64xi32>
    %42 = arith.shrsi %40, %41 : vector<64x64xi32>
    %43 = arith.cmpi eq, %39, %42 : vector<64x64xi32>
    %44 = arith.extui %43 : vector<64x64xi1> to vector<64x64xi32>
    %45 = arith.sitofp %44 : vector<64x64xi32> to vector<64x64xf32>
    %c120 = arith.constant 120 : index
    %c0_11 = arith.constant 0 : index
    %46 = vector.load %arg1[%c120, %c0_11] : memref<392x128xf32, #tpu.memory_space<vmem>>, vector<32x96xf32>
    %c152 = arith.constant 152 : index
    %c0_12 = arith.constant 0 : index
    %47 = vector.load %arg1[%c152, %c0_12] : memref<392x128xf32, #tpu.memory_space<vmem>>, vector<32x32xf32>
    %c184 = arith.constant 184 : index
    %c0_13 = arith.constant 0 : index
    %48 = vector.load %arg1[%c184, %c0_13] : memref<392x128xf32, #tpu.memory_space<vmem>>, vector<32x128xf32>
    %c216 = arith.constant 216 : index
    %c0_14 = arith.constant 0 : index
    %49 = vector.load %arg1[%c216, %c0_14] : memref<392x128xf32, #tpu.memory_space<vmem>>, vector<32x128xf32>
    %c248 = arith.constant 248 : index
    %c0_15 = arith.constant 0 : index
    %50 = vector.load %arg1[%c248, %c0_15] : memref<392x128xf32, #tpu.memory_space<vmem>>, vector<8x128xf32>
    %51 = vector.extract_strided_slice %50 {offsets = [0, 0], sizes = [1, 96], strides = [1, 1]} : vector<8x128xf32> to vector<1x96xf32>
    %52 = vector.extract_strided_slice %50 {offsets = [1, 0], sizes = [1, 32], strides = [1, 1]} : vector<8x128xf32> to vector<1x32xf32>
    %53 = vector.extract_strided_slice %50 {offsets = [2, 0], sizes = [1, 32], strides = [1, 1]} : vector<8x128xf32> to vector<1x32xf32>
    %54 = vector.extract_strided_slice %50 {offsets = [3, 0], sizes = [1, 32], strides = [1, 1]} : vector<8x128xf32> to vector<1x32xf32>
    %55 = vector.extract_strided_slice %50 {offsets = [4, 0], sizes = [1, 32], strides = [1, 1]} : vector<8x128xf32> to vector<1x32xf32>
    %56 = vector.extract_strided_slice %50 {offsets = [5, 0], sizes = [1, 32], strides = [1, 1]} : vector<8x128xf32> to vector<1x32xf32>
    %57 = vector.extract_strided_slice %50 {offsets = [6, 0], sizes = [1, 128], strides = [1, 1]} : vector<8x128xf32> to vector<1x128xf32>
    %58 = vector.extract_strided_slice %50 {offsets = [7, 0], sizes = [1, 32], strides = [1, 1]} : vector<8x128xf32> to vector<1x32xf32>
    %cst_16 = arith.constant dense<0.000000e+00> : vector<16x96xf32>
    %59 = tpu.matmul %9, %46, %cst_16 {dimension_numbers = #tpu.dot_dimension_numbers<[1], [0], [0], [1], [0, 0, 1, 1], [], []>} : vector<16x32xf32>, vector<32x96xf32>, vector<16x96xf32> -> vector<16x96xf32>
    %60 = vector.broadcast %51 : vector<1x96xf32> to vector<16x96xf32>
    %61 = arith.addf %59, %60 : vector<16x96xf32>
    %62 = vector.extract_strided_slice %61 {offsets = [0, 0], sizes = [16, 32], strides = [1, 1]} : vector<16x96xf32> to vector<16x32xf32>
    %63 = vector.extract_strided_slice %61 {offsets = [0, 32], sizes = [16, 32], strides = [1, 1]} : vector<16x96xf32> to vector<16x32xf32>
    %64 = vector.extract_strided_slice %61 {offsets = [0, 64], sizes = [16, 32], strides = [1, 1]} : vector<16x96xf32> to vector<16x32xf32>
    %65 = tpu.concatenate %63, %63, %63, %63 in 0 : vector<16x32xf32>, vector<16x32xf32>, vector<16x32xf32>, vector<16x32xf32> -> vector<64x32xf32>
    %66 = arith.mulf %65, %36 : vector<64x32xf32>
    %67 = tpu.concatenate %64, %64, %64, %64 in 0 : vector<16x32xf32>, vector<16x32xf32>, vector<16x32xf32>, vector<16x32xf32> -> vector<64x32xf32>
    %68 = arith.mulf %67, %36 : vector<64x32xf32>
    "tpu.trace_start"() <{level = 10 : i32, message = "qe,ce->qc"}> : () -> ()
    %cst_17 = arith.constant dense<0.000000e+00> : vector<16x64xf32>
    %69 = tpu.matmul %62, %66, %cst_17 {dimension_numbers = #tpu.dot_dimension_numbers<[1], [1], [0], [0], [0, 0, 1, 0], [], []>} : vector<16x32xf32>, vector<64x32xf32>, vector<16x64xf32> -> vector<16x64xf32>
    "tpu.trace_stop"() : () -> ()
    %cst_18 = arith.constant 0.353553385 : f32
    %70 = vector.broadcast %cst_18 : f32 to vector<16x64xf32>
    %71 = arith.mulf %69, %70 : vector<16x64xf32>
    %72 = arith.addf %71, %27 : vector<16x64xf32>
    %cst_19 = arith.constant dense<0xFF800000> : vector<16xf32>
    %73 = vector.multi_reduction <maximumf>, %72, %cst_19 [1] : vector<16x64xf32> to vector<16xf32>
    %74 = vector.shape_cast %73 : vector<16xf32> to vector<16x1xf32>
    %75 = vector.broadcast %74 : vector<16x1xf32> to vector<16x64xf32>
    %76 = arith.subf %72, %75 : vector<16x64xf32>
    %77 = math.exp %76 : vector<16x64xf32>
    %cst_20 = arith.constant dense<0.000000e+00> : vector<16x64xf32>
    %78 = tpu.matmul %77, %45, %cst_20 {dimension_numbers = #tpu.dot_dimension_numbers<[1], [0], [0], [1], [0, 0, 1, 1], [], []>} : vector<16x64xf32>, vector<64x64xf32>, vector<16x64xf32> -> vector<16x64xf32>
    %79 = tpu.reciprocal %78 {approx = true} : vector<16x64xf32> -> vector<16x64xf32>
    %80 = arith.mulf %77, %79 : vector<16x64xf32>
    %cst_21 = arith.constant dense<0.000000e+00> : vector<16x32xf32>
    %81 = tpu.matmul %80, %68, %cst_21 {dimension_numbers = #tpu.dot_dimension_numbers<[1], [0], [0], [1], [0, 0, 1, 1], [], []>} : vector<16x64xf32>, vector<64x32xf32>, vector<16x32xf32> -> vector<16x32xf32>
    %cst_22 = arith.constant dense<0.000000e+00> : vector<16x32xf32>
    %82 = tpu.matmul %81, %47, %cst_22 {dimension_numbers = #tpu.dot_dimension_numbers<[1], [0], [0], [1], [0, 0, 1, 1], [], []>} : vector<16x32xf32>, vector<32x32xf32>, vector<16x32xf32> -> vector<16x32xf32>
    %83 = vector.broadcast %52 : vector<1x32xf32> to vector<16x32xf32>
    %84 = arith.addf %82, %83 : vector<16x32xf32>
    %85 = arith.addf %84, %9 : vector<16x32xf32>
    %cst_23 = arith.constant dense<0.000000e+00> : vector<16xf32>
    %86 = vector.multi_reduction <add>, %85, %cst_23 [1] : vector<16x32xf32> to vector<16xf32>
    %87 = vector.shape_cast %86 : vector<16xf32> to vector<16x1xf32>
    %cst_24 = arith.constant 3.200000e+01 : f32
    %88 = vector.broadcast %cst_24 : f32 to vector<16x1xf32>
    %89 = arith.divf %87, %88 : vector<16x1xf32>
    %90 = vector.broadcast %89 : vector<16x1xf32> to vector<16x32xf32>
    %91 = arith.subf %85, %90 : vector<16x32xf32>
    %92 = arith.mulf %91, %91 : vector<16x32xf32>
    %cst_25 = arith.constant dense<0.000000e+00> : vector<16xf32>
    %93 = vector.multi_reduction <add>, %92, %cst_25 [1] : vector<16x32xf32> to vector<16xf32>
    %94 = vector.shape_cast %93 : vector<16xf32> to vector<16x1xf32>
    %cst_26 = arith.constant 3.200000e+01 : f32
    %95 = vector.broadcast %cst_26 : f32 to vector<16x1xf32>
    %96 = arith.divf %94, %95 : vector<16x1xf32>
    %97 = vector.broadcast %89 : vector<16x1xf32> to vector<16x32xf32>
    %98 = arith.subf %85, %97 : vector<16x32xf32>
    %cst_27 = arith.constant 9.99999974E-6 : f32
    %99 = vector.broadcast %cst_27 : f32 to vector<16x1xf32>
    %100 = arith.addf %96, %99 : vector<16x1xf32>
    %101 = math.rsqrt %100 : vector<16x1xf32>
    %102 = vector.broadcast %101 : vector<16x1xf32> to vector<16x32xf32>
    %103 = arith.mulf %98, %102 : vector<16x32xf32>
    %104 = vector.broadcast %53 : vector<1x32xf32> to vector<16x32xf32>
    %105 = arith.mulf %103, %104 : vector<16x32xf32>
    %106 = vector.broadcast %54 : vector<1x32xf32> to vector<16x32xf32>
    %107 = arith.addf %105, %106 : vector<16x32xf32>
    %cst_28 = arith.constant dense<0.000000e+00> : vector<16x128xf32>
    %108 = tpu.matmul %107, %48, %cst_28 {dimension_numbers = #tpu.dot_dimension_numbers<[1], [0], [0], [1], [0, 0, 1, 1], [], []>} : vector<16x32xf32>, vector<32x128xf32>, vector<16x128xf32> -> vector<16x128xf32>
    %109 = vector.broadcast %57 : vector<1x128xf32> to vector<16x128xf32>
    %110 = arith.addf %108, %109 : vector<16x128xf32>
    %cst_29 = arith.constant 0.000000e+00 : f32
    %111 = vector.broadcast %cst_29 : f32 to vector<16x128xf32>
    %112 = arith.maximumf %110, %111 : vector<16x128xf32>
    "tpu.trace_start"() <{level = 10 : i32, message = "qf,ef->qe"}> : () -> ()
    %cst_30 = arith.constant dense<0.000000e+00> : vector<16x32xf32>
    %113 = tpu.matmul %112, %49, %cst_30 {dimension_numbers = #tpu.dot_dimension_numbers<[1], [1], [0], [0], [0, 0, 1, 0], [], []>} : vector<16x128xf32>, vector<32x128xf32>, vector<16x32xf32> -> vector<16x32xf32>
    "tpu.trace_stop"() : () -> ()
    %114 = vector.broadcast %58 : vector<1x32xf32> to vector<16x32xf32>
    %115 = arith.addf %113, %114 : vector<16x32xf32>
    %116 = arith.addf %115, %107 : vector<16x32xf32>
    %cst_31 = arith.constant dense<0.000000e+00> : vector<16xf32>
    %117 = vector.multi_reduction <add>, %116, %cst_31 [1] : vector<16x32xf32> to vector<16xf32>
    %118 = vector.shape_cast %117 : vector<16xf32> to vector<16x1xf32>
    %cst_32 = arith.constant 3.200000e+01 : f32
    %119 = vector.broadcast %cst_32 : f32 to vector<16x1xf32>
    %120 = arith.divf %118, %119 : vector<16x1xf32>
    %121 = vector.broadcast %120 : vector<16x1xf32> to vector<16x32xf32>
    %122 = arith.subf %116, %121 : vector<16x32xf32>
    %123 = arith.mulf %122, %122 : vector<16x32xf32>
    %cst_33 = arith.constant dense<0.000000e+00> : vector<16xf32>
    %124 = vector.multi_reduction <add>, %123, %cst_33 [1] : vector<16x32xf32> to vector<16xf32>
    %125 = vector.shape_cast %124 : vector<16xf32> to vector<16x1xf32>
    %cst_34 = arith.constant 3.200000e+01 : f32
    %126 = vector.broadcast %cst_34 : f32 to vector<16x1xf32>
    %127 = arith.divf %125, %126 : vector<16x1xf32>
    %128 = vector.broadcast %120 : vector<16x1xf32> to vector<16x32xf32>
    %129 = arith.subf %116, %128 : vector<16x32xf32>
    %cst_35 = arith.constant 9.99999974E-6 : f32
    %130 = vector.broadcast %cst_35 : f32 to vector<16x1xf32>
    %131 = arith.addf %127, %130 : vector<16x1xf32>
    %132 = math.rsqrt %131 : vector<16x1xf32>
    %133 = vector.broadcast %132 : vector<16x1xf32> to vector<16x32xf32>
    %134 = arith.mulf %129, %133 : vector<16x32xf32>
    %135 = vector.broadcast %55 : vector<1x32xf32> to vector<16x32xf32>
    %136 = arith.mulf %134, %135 : vector<16x32xf32>
    %137 = vector.broadcast %56 : vector<1x32xf32> to vector<16x32xf32>
    %138 = arith.addf %136, %137 : vector<16x32xf32>
    %c256 = arith.constant 256 : index
    %c0_36 = arith.constant 0 : index
    %139 = vector.load %arg1[%c256, %c0_36] : memref<392x128xf32, #tpu.memory_space<vmem>>, vector<32x96xf32>
    %c288 = arith.constant 288 : index
    %c0_37 = arith.constant 0 : index
    %140 = vector.load %arg1[%c288, %c0_37] : memref<392x128xf32, #tpu.memory_space<vmem>>, vector<32x32xf32>
    %c320 = arith.constant 320 : index
    %c0_38 = arith.constant 0 : index
    %141 = vector.load %arg1[%c320, %c0_38] : memref<392x128xf32, #tpu.memory_space<vmem>>, vector<32x128xf32>
    %c352 = arith.constant 352 : index
    %c0_39 = arith.constant 0 : index
    %142 = vector.load %arg1[%c352, %c0_39] : memref<392x128xf32, #tpu.memory_space<vmem>>, vector<32x128xf32>
    %c384 = arith.constant 384 : index
    %c0_40 = arith.constant 0 : index
    %143 = vector.load %arg1[%c384, %c0_40] : memref<392x128xf32, #tpu.memory_space<vmem>>, vector<8x128xf32>
    %144 = vector.extract_strided_slice %143 {offsets = [0, 0], sizes = [1, 96], strides = [1, 1]} : vector<8x128xf32> to vector<1x96xf32>
    %145 = vector.extract_strided_slice %143 {offsets = [1, 0], sizes = [1, 32], strides = [1, 1]} : vector<8x128xf32> to vector<1x32xf32>
    %146 = vector.extract_strided_slice %143 {offsets = [2, 0], sizes = [1, 32], strides = [1, 1]} : vector<8x128xf32> to vector<1x32xf32>
    %147 = vector.extract_strided_slice %143 {offsets = [3, 0], sizes = [1, 32], strides = [1, 1]} : vector<8x128xf32> to vector<1x32xf32>
    %148 = vector.extract_strided_slice %143 {offsets = [4, 0], sizes = [1, 32], strides = [1, 1]} : vector<8x128xf32> to vector<1x32xf32>
    %149 = vector.extract_strided_slice %143 {offsets = [5, 0], sizes = [1, 32], strides = [1, 1]} : vector<8x128xf32> to vector<1x32xf32>
    %150 = vector.extract_strided_slice %143 {offsets = [6, 0], sizes = [1, 128], strides = [1, 1]} : vector<8x128xf32> to vector<1x128xf32>
    %151 = vector.extract_strided_slice %143 {offsets = [7, 0], sizes = [1, 32], strides = [1, 1]} : vector<8x128xf32> to vector<1x32xf32>
    %cst_41 = arith.constant dense<0.000000e+00> : vector<16x96xf32>
    %152 = tpu.matmul %138, %139, %cst_41 {dimension_numbers = #tpu.dot_dimension_numbers<[1], [0], [0], [1], [0, 0, 1, 1], [], []>} : vector<16x32xf32>, vector<32x96xf32>, vector<16x96xf32> -> vector<16x96xf32>
    %153 = vector.broadcast %144 : vector<1x96xf32> to vector<16x96xf32>
    %154 = arith.addf %152, %153 : vector<16x96xf32>
    %155 = vector.extract_strided_slice %154 {offsets = [0, 0], sizes = [16, 32], strides = [1, 1]} : vector<16x96xf32> to vector<16x32xf32>
    %156 = vector.extract_strided_slice %154 {offsets = [0, 32], sizes = [16, 32], strides = [1, 1]} : vector<16x96xf32> to vector<16x32xf32>
    %157 = vector.extract_strided_slice %154 {offsets = [0, 64], sizes = [16, 32], strides = [1, 1]} : vector<16x96xf32> to vector<16x32xf32>
    %158 = tpu.concatenate %156, %156, %156, %156 in 0 : vector<16x32xf32>, vector<16x32xf32>, vector<16x32xf32>, vector<16x32xf32> -> vector<64x32xf32>
    %159 = arith.mulf %158, %36 : vector<64x32xf32>
    %160 = tpu.concatenate %157, %157, %157, %157 in 0 : vector<16x32xf32>, vector<16x32xf32>, vector<16x32xf32>, vector<16x32xf32> -> vector<64x32xf32>
    %161 = arith.mulf %160, %36 : vector<64x32xf32>
    "tpu.trace_start"() <{level = 10 : i32, message = "qe,ce->qc"}> : () -> ()
    %cst_42 = arith.constant dense<0.000000e+00> : vector<16x64xf32>
    %162 = tpu.matmul %155, %159, %cst_42 {dimension_numbers = #tpu.dot_dimension_numbers<[1], [1], [0], [0], [0, 0, 1, 0], [], []>} : vector<16x32xf32>, vector<64x32xf32>, vector<16x64xf32> -> vector<16x64xf32>
    "tpu.trace_stop"() : () -> ()
    %cst_43 = arith.constant 0.353553385 : f32
    %163 = vector.broadcast %cst_43 : f32 to vector<16x64xf32>
    %164 = arith.mulf %162, %163 : vector<16x64xf32>
    %165 = arith.addf %164, %27 : vector<16x64xf32>
    %cst_44 = arith.constant dense<0xFF800000> : vector<16xf32>
    %166 = vector.multi_reduction <maximumf>, %165, %cst_44 [1] : vector<16x64xf32> to vector<16xf32>
    %167 = vector.shape_cast %166 : vector<16xf32> to vector<16x1xf32>
    %168 = vector.broadcast %167 : vector<16x1xf32> to vector<16x64xf32>
    %169 = arith.subf %165, %168 : vector<16x64xf32>
    %170 = math.exp %169 : vector<16x64xf32>
    %cst_45 = arith.constant dense<0.000000e+00> : vector<16x64xf32>
    %171 = tpu.matmul %170, %45, %cst_45 {dimension_numbers = #tpu.dot_dimension_numbers<[1], [0], [0], [1], [0, 0, 1, 1], [], []>} : vector<16x64xf32>, vector<64x64xf32>, vector<16x64xf32> -> vector<16x64xf32>
    %172 = tpu.reciprocal %171 {approx = true} : vector<16x64xf32> -> vector<16x64xf32>
    %173 = arith.mulf %170, %172 : vector<16x64xf32>
    %cst_46 = arith.constant dense<0.000000e+00> : vector<16x32xf32>
    %174 = tpu.matmul %173, %161, %cst_46 {dimension_numbers = #tpu.dot_dimension_numbers<[1], [0], [0], [1], [0, 0, 1, 1], [], []>} : vector<16x64xf32>, vector<64x32xf32>, vector<16x32xf32> -> vector<16x32xf32>
    %cst_47 = arith.constant dense<0.000000e+00> : vector<16x32xf32>
    %175 = tpu.matmul %174, %140, %cst_47 {dimension_numbers = #tpu.dot_dimension_numbers<[1], [0], [0], [1], [0, 0, 1, 1], [], []>} : vector<16x32xf32>, vector<32x32xf32>, vector<16x32xf32> -> vector<16x32xf32>
    %176 = vector.broadcast %145 : vector<1x32xf32> to vector<16x32xf32>
    %177 = arith.addf %175, %176 : vector<16x32xf32>
    %178 = arith.addf %177, %138 : vector<16x32xf32>
    %cst_48 = arith.constant dense<0.000000e+00> : vector<16xf32>
    %179 = vector.multi_reduction <add>, %178, %cst_48 [1] : vector<16x32xf32> to vector<16xf32>
    %180 = vector.shape_cast %179 : vector<16xf32> to vector<16x1xf32>
    %cst_49 = arith.constant 3.200000e+01 : f32
    %181 = vector.broadcast %cst_49 : f32 to vector<16x1xf32>
    %182 = arith.divf %180, %181 : vector<16x1xf32>
    %183 = vector.broadcast %182 : vector<16x1xf32> to vector<16x32xf32>
    %184 = arith.subf %178, %183 : vector<16x32xf32>
    %185 = arith.mulf %184, %184 : vector<16x32xf32>
    %cst_50 = arith.constant dense<0.000000e+00> : vector<16xf32>
    %186 = vector.multi_reduction <add>, %185, %cst_50 [1] : vector<16x32xf32> to vector<16xf32>
    %187 = vector.shape_cast %186 : vector<16xf32> to vector<16x1xf32>
    %cst_51 = arith.constant 3.200000e+01 : f32
    %188 = vector.broadcast %cst_51 : f32 to vector<16x1xf32>
    %189 = arith.divf %187, %188 : vector<16x1xf32>
    %190 = vector.broadcast %182 : vector<16x1xf32> to vector<16x32xf32>
    %191 = arith.subf %178, %190 : vector<16x32xf32>
    %cst_52 = arith.constant 9.99999974E-6 : f32
    %192 = vector.broadcast %cst_52 : f32 to vector<16x1xf32>
    %193 = arith.addf %189, %192 : vector<16x1xf32>
    %194 = math.rsqrt %193 : vector<16x1xf32>
    %195 = vector.broadcast %194 : vector<16x1xf32> to vector<16x32xf32>
    %196 = arith.mulf %191, %195 : vector<16x32xf32>
    %197 = vector.broadcast %146 : vector<1x32xf32> to vector<16x32xf32>
    %198 = arith.mulf %196, %197 : vector<16x32xf32>
    %199 = vector.broadcast %147 : vector<1x32xf32> to vector<16x32xf32>
    %200 = arith.addf %198, %199 : vector<16x32xf32>
    %cst_53 = arith.constant dense<0.000000e+00> : vector<16x128xf32>
    %201 = tpu.matmul %200, %141, %cst_53 {dimension_numbers = #tpu.dot_dimension_numbers<[1], [0], [0], [1], [0, 0, 1, 1], [], []>} : vector<16x32xf32>, vector<32x128xf32>, vector<16x128xf32> -> vector<16x128xf32>
    %202 = vector.broadcast %150 : vector<1x128xf32> to vector<16x128xf32>
    %203 = arith.addf %201, %202 : vector<16x128xf32>
    %cst_54 = arith.constant 0.000000e+00 : f32
    %204 = vector.broadcast %cst_54 : f32 to vector<16x128xf32>
    %205 = arith.maximumf %203, %204 : vector<16x128xf32>
    "tpu.trace_start"() <{level = 10 : i32, message = "qf,ef->qe"}> : () -> ()
    %cst_55 = arith.constant dense<0.000000e+00> : vector<16x32xf32>
    %206 = tpu.matmul %205, %142, %cst_55 {dimension_numbers = #tpu.dot_dimension_numbers<[1], [1], [0], [0], [0, 0, 1, 0], [], []>} : vector<16x128xf32>, vector<32x128xf32>, vector<16x32xf32> -> vector<16x32xf32>
    "tpu.trace_stop"() : () -> ()
    %207 = vector.broadcast %151 : vector<1x32xf32> to vector<16x32xf32>
    %208 = arith.addf %206, %207 : vector<16x32xf32>
    %209 = arith.addf %208, %200 : vector<16x32xf32>
    %cst_56 = arith.constant dense<0.000000e+00> : vector<16xf32>
    %210 = vector.multi_reduction <add>, %209, %cst_56 [1] : vector<16x32xf32> to vector<16xf32>
    %211 = vector.shape_cast %210 : vector<16xf32> to vector<16x1xf32>
    %cst_57 = arith.constant 3.200000e+01 : f32
    %212 = vector.broadcast %cst_57 : f32 to vector<16x1xf32>
    %213 = arith.divf %211, %212 : vector<16x1xf32>
    %214 = vector.broadcast %213 : vector<16x1xf32> to vector<16x32xf32>
    %215 = arith.subf %209, %214 : vector<16x32xf32>
    %216 = arith.mulf %215, %215 : vector<16x32xf32>
    %cst_58 = arith.constant dense<0.000000e+00> : vector<16xf32>
    %217 = vector.multi_reduction <add>, %216, %cst_58 [1] : vector<16x32xf32> to vector<16xf32>
    %218 = vector.shape_cast %217 : vector<16xf32> to vector<16x1xf32>
    %cst_59 = arith.constant 3.200000e+01 : f32
    %219 = vector.broadcast %cst_59 : f32 to vector<16x1xf32>
    %220 = arith.divf %218, %219 : vector<16x1xf32>
    %221 = vector.broadcast %213 : vector<16x1xf32> to vector<16x32xf32>
    %222 = arith.subf %209, %221 : vector<16x32xf32>
    %cst_60 = arith.constant 9.99999974E-6 : f32
    %223 = vector.broadcast %cst_60 : f32 to vector<16x1xf32>
    %224 = arith.addf %220, %223 : vector<16x1xf32>
    %225 = math.rsqrt %224 : vector<16x1xf32>
    %226 = vector.broadcast %225 : vector<16x1xf32> to vector<16x32xf32>
    %227 = arith.mulf %222, %226 : vector<16x32xf32>
    %228 = vector.broadcast %148 : vector<1x32xf32> to vector<16x32xf32>
    %229 = arith.mulf %227, %228 : vector<16x32xf32>
    %230 = vector.broadcast %149 : vector<1x32xf32> to vector<16x32xf32>
    %231 = arith.addf %229, %230 : vector<16x32xf32>
    %c80 = arith.constant 80 : index
    %c0_61 = arith.constant 0 : index
    %232 = vector.load %arg1[%c80, %c0_61] : memref<392x128xf32, #tpu.memory_space<vmem>>, vector<32x128xf32>
    %c112 = arith.constant 112 : index
    %c0_62 = arith.constant 0 : index
    %233 = vector.load %arg1[%c112, %c0_62] : memref<392x128xf32, #tpu.memory_space<vmem>>, vector<1x128xf32>
    %cst_63 = arith.constant dense<0.000000e+00> : vector<16x128xf32>
    %234 = tpu.matmul %231, %232, %cst_63 {dimension_numbers = #tpu.dot_dimension_numbers<[1], [0], [0], [1], [0, 0, 1, 1], [], []>} : vector<16x32xf32>, vector<32x128xf32>, vector<16x128xf32> -> vector<16x128xf32>
    %235 = vector.broadcast %233 : vector<1x128xf32> to vector<16x128xf32>
    %236 = arith.addf %234, %235 : vector<16x128xf32>
    %c0_64 = arith.constant 0 : index
    %c0_65 = arith.constant 0 : index
    %237 = vector.load %arg2[%c0_64, %c0_65] : memref<16x128xf32, #tpu.memory_space<vmem>>, vector<16x128xf32>
    tpu.vector_store %arg2[%c0_64, %c0_65], %236 {strides = array<i32>} : memref<16x128xf32, #tpu.memory_space<vmem>>, vector<16x128xf32>,
    return
  }
}

</mosaic_0001>

<llo_original>
// kernel: transformer_forward.1
$region0: #{transformer_forward.1}
  #allocation0 [shape = 'u32[]', space=smem, size = 0x4, offset = 0x4, fixed_abs, tag = 'smem constant byte address 0x4 - core index']
  #allocation1 [shape = 'u32[144,128]{1,0:T(1,128)}', space=vmem, size = 0x12000, scoped, tag = 'internal scratch']
  %s0 = inlined_call_operand.vmem [shape: s32[16,1], index: 0, kind: input, shape index: {}]
  %s1 = inlined_call_operand.hbm [shape: f32[392,128], index: 1, kind: input, shape index: {}]
  %s2 = inlined_call_operand.vmem [shape: f32[16,128], index: 2, kind: output, shape index: {}]
  %s3 = sld [smem:[#allocation0]]
  $region22: #{transformer_forward.1} parent=0
    _
  %s5 = ssub.s32 1, %s3
  %s6 = scalar_select 0, %s5, %s3
  $region1: #{transformer_forward.1} parent=0
    #allocation2 [shape = 'u8[200704]{0}', space=vmem, size = 0x31000, scoped, tag = 'input window, operand 1, single buffered']
    #allocation3 [shape = 's32[1]{0}', space=sflag, size = 0x4, scoped, tag = 'scoped memory for transformer_forward.1']
    %7 = vsyncpa [#allocation3], 0
    // Predicated region
    $region2: #{transformer_forward.1} parent=1 // pred_check
      _
    $region3: #{transformer_forward.1} parent=1 // pred_check_branch
      %9 = sbr.rel (0) target = $region5
    $region4: #{transformer_forward.1} parent=1 // pred_region
      _
    $region5: #{transformer_forward.1} parent=1 // pred_fallthru
      _
    // Predicated region
    $region6: #{transformer_forward.1} parent=1 // pred_check
      _
    $region7: #{transformer_forward.1} parent=1 // pred_check_branch
      %11 = sbr.rel (0) target = $region9
    $region8: #{transformer_forward.1} parent=1 // pred_region
      %s13 = ssub.s32 6272, 6272
      %14 = vsyncadd [#allocation3], %s13
      %s15 = sshll.u32 [#allocation2], 4
      %s16 = int_to_ptr.vmem [resolvable:$true] %s15
      %21 = dma.hbm_to_vmem [thread:$0]  %s1, 6272, %s16, [#allocation3], 128, 128, 8
    $region9: #{transformer_forward.1} parent=1 // pred_fallthru
      _
    // Predicated region
    $region10: #{transformer_forward.1} parent=1 // pred_check
      _
    $region11: #{transformer_forward.1} parent=1 // pred_check_branch
      %23 = sbr.rel (0) target = $region13
    $region12: #{transformer_forward.1} parent=1 // pred_region
      %24 = dma.done [#allocation3], 6272
    $region13: #{transformer_forward.1} parent=1 // pred_fallthru
      _
    %v25 = vld [vmem:[%s0] sm:$0xff]
    %v26 = vld [vmem:[%s0 + $0x8] sm:$0xff]
    %v27 = vlaneseq
    %v28 = vand.u32 %v27, 127
    %29 = vset.pattern.permute.xlu0 0
    %30 = vperm.xlu0 %29, %v25
    %v31 = vpop.permute.xlu0 %30
    %32 = vset.pattern.permute.xlu0 0
    %33 = vperm.xlu0 %32, %v26
    %v34 = vpop.permute.xlu0 %33
    %vm35 = vcmp.eq.s32.totalorder %v31, %v28
    %vm36 = vcmp.eq.s32.totalorder %v34, %v28
    %v37 = vsel %vm35, 1, 0
    %v38 = vsel %vm36, 1, 0
    %v39 = vcvt.s32.f32 %v37
    %v40 = vcvt.s32.f32 %v38
    %v41 = vld [vmem:[#allocation2] sm:$0xff]
    %v42 = vld [vmem:[#allocation2 + $0x8] sm:$0xff]
    %v43 = vld [vmem:[#allocation2 + $0x10] sm:$0xff]
    %v44 = vld [vmem:[#allocation2 + $0x18] sm:$0xff]
    %v45 = vld [vmem:[#allocation2 + $0x20] sm:$0xff]
    %v46 = vld [vmem:[#allocation2 + $0x28] sm:$0xff]
    %v47 = vld [vmem:[#allocation2 + $0x30] sm:$0xff]
    %v48 = vld [vmem:[#allocation2 + $0x38] sm:$0xff]
    %v49 = vld [vmem:[#allocation2 + $0x40] sm:$0xff]
    %v50 = vld [vmem:[#allocation2 + $0x48] sm:$0xff]
    %vm51 = vcmask 523264
    %v53 = vsel %vm51, %v39, 0
    %v56 = vsel %vm51, %v40, 0
    %58 = vmatprep.subr.mxu0 0.0
    %59 = vmatpush1.msra.mxu0 0.0
    %60 = vmatprep.subr.mxu0 0.0
    %61 = vmatpush1.msra.mxu0 0.0
    %62 = vmatprep.subr.mxu0 0.0
    %63 = vmatpush1.msra.mxu0 0.0
    %64 = vmatprep.subr.mxu0 0.0
    %65 = vmatpush1.msra.mxu0 0.0
    %66 = vmatprep.subr.mxu0 0.0
    %67 = vmatpush1.msra.mxu0 0.0
    %68 = vmatprep.subr.mxu0 0.0
    %69 = vmatpush1.msra.mxu0 0.0
    %70 = vmatprep.subr.mxu0 0.0
    %71 = vmatpush1.msra.mxu0 0.0
    %72 = vmatprep.subr.mxu0 0.0
    %73 = vmatpush1.msra.mxu0 0.0
    %74 = vmatprep.subr.mxu0 0.0
    %75 = vmatpush1.msra.mxu0 %v48
    %76 = vmatprep.subr.mxu0 0.0
    %77 = vmatpush1.msra.mxu0 %v47
    %78 = vmatprep.subr.mxu0 0.0
    %79 = vmatpush1.msra.mxu0 %v46
    %80 = vmatprep.subr.mxu0 0.0
    %81 = vmatpush1.msra.mxu0 %v45
    %82 = vmatprep.subr.mxu0 0.0
    %83 = vmatpush1.msra.mxu0 %v44
    %84 = vmatprep.subr.mxu0 0.0
    %85 = vmatpush1.msra.mxu0 %v43
    %86 = vmatprep.subr.mxu0 0.0
    %87 = vmatpush1.msra.mxu0 %v42
    %88 = vmatprep.subr.mxu0 0.0
    %89 = vmatpush1.msra.mxu0 %v41
    %90 = vmatprep.subr.mxu0 0.0
    %91 = vmatpush2.msra.mxu0 0.0
    %92 = vmatprep.subr.mxu0 0.0
    %93 = vmatpush2.msra.mxu0 0.0
    %94 = vmatprep.subr.mxu0 0.0
    %95 = vmatpush2.msra.mxu0 0.0
    %96 = vmatprep.subr.mxu0 0.0
    %97 = vmatpush2.msra.mxu0 0.0
    %98 = vmatprep.subr.mxu0 0.0
    %99 = vmatpush2.msra.mxu0 0.0
    %100 = vmatprep.subr.mxu0 0.0
    %101 = vmatpush2.msra.mxu0 0.0
    %102 = vmatprep.subr.mxu0 0.0
    %103 = vmatpush2.msra.mxu0 0.0
    %104 = vmatprep.subr.mxu0 0.0
    %105 = vmatpush2.msra.mxu0 0.0
    %106 = vmatprep.subr.mxu0 0.0
    %107 = vmatpush2.msra.mxu0 0.0
    %108 = vmatprep.subr.mxu0 0.0
    %109 = vmatpush2.msra.mxu0 0.0
    %110 = vmatprep.subr.mxu0 0.0
    %111 = vmatpush2.msra.mxu0 0.0
    %112 = vmatprep.subr.mxu0 0.0
    %113 = vmatpush2.msra.mxu0 0.0
    %114 = vmatprep.subr.mxu0 0.0
    %115 = vmatpush2.msra.mxu0 0.0
    %116 = vmatprep.subr.mxu0 0.0
    %117 = vmatpush2.msra.mxu0 0.0
    %118 = vmatprep.subr.mxu0 0.0
    %119 = vmatpush2.msra.mxu0 0.0
    %120 = vmatprep.subr.mxu0 0.0
    %121 = vmatpush2.msra.mxu0 0.0
    %122 = vmatprep.mubr.f32.mxu0 0.0
    %123 = vmatmul.mubr.f32.gmra.mxu0 %v53
    %v124 = vpop.f32.mrf.mxu0
    %v125 = vadd.f32 %v49, %v124
    %v126 = vpop.f32.mrf.mxu0
    %127 = vmatprep.mubr.f32.mxu0 0.0
    %128 = vmatmul.mubr.f32.gmra.mxu0 %v56
    %v129 = vpop.f32.mrf.mxu0
    %v130 = vadd.f32 %v50, %v129
    %v131 = vpop.f32.mrf.mxu0
    %132 = vdwg.mxu0
    %v133 = vlaneseq
    %v134 = vshrl.u32 %v133, 7
    %v135 = vadd.s32 %v134, 8
    %v136 = vand.u32 %v28, 15
    %v137 = vshra.s32 %v136, 3
    %v138 = vshra.s32 %v134, 3
    %v139 = vshra.s32 %v135, 3
    %vm140 = vcmp.eq.s32.totalorder %v137, %v138
    %vm141 = vcmp.eq.s32.totalorder %v137, %v139
    %v142 = vand.u32 %v136, 7
    %v143 = vand.u32 %v134, 7
    %v144 = vand.u32 %v135, 7
    %vm145 = vcmp.le.s32.totalorder %v142, %v143
    %vm146 = vcmp.le.s32.totalorder %v142, %v144
    %vm147 = vmand %vm140, %vm145
    %vm148 = vmand %vm141, %vm146
    %v149 = vsel %vm147, 0.0, -1e+30
    %v150 = vsel %vm148, 0.0, -1e+30
    %v151 = vadd.s32 %v134, 16
    %v152 = vadd.s32 %v134, 24
    %v153 = vadd.s32 %v134, 32
    %v154 = vadd.s32 %v134, 40
    %v155 = vadd.s32 %v134, 48
    %v156 = vadd.s32 %v134, 56
    %v157 = vshra.s32 %v134, 4
    %v158 = vshra.s32 %v135, 4
    %v159 = vshra.s32 %v151, 4
    %v160 = vshra.s32 %v152, 4
    %v161 = vshra.s32 %v153, 4
    %v162 = vshra.s32 %v154, 4
    %v163 = vshra.s32 %v155, 4
    %v164 = vshra.s32 %v156, 4
    %v165 = vshra.s32 %v28, 3
    %vm166 = vcmp.eq.s32.totalorder %v157, %v165
    %vm167 = vcmp.eq.s32.totalorder %v158, %v165
    %vm168 = vcmp.eq.s32.totalorder %v159, %v165
    %vm169 = vcmp.eq.s32.totalorder %v160, %v165
    %vm170 = vcmp.eq.s32.totalorder %v161, %v165
    %vm171 = vcmp.eq.s32.totalorder %v162, %v165
    %vm172 = vcmp.eq.s32.totalorder %v163, %v165
    %vm173 = vcmp.eq.s32.totalorder %v164, %v165
    %v174 = vsel %vm166, 1, 0
    %v175 = vsel %vm167, 1, 0
    %v176 = vsel %vm168, 1, 0
    %v177 = vsel %vm169, 1, 0
    %v178 = vsel %vm170, 1, 0
    %v179 = vsel %vm171, 1, 0
    %v180 = vsel %vm172, 1, 0
    %v181 = vsel %vm173, 1, 0
    %v182 = vcvt.s32.f32 %v174
    %v183 = vcvt.s32.f32 %v175
    %v184 = vcvt.s32.f32 %v176
    %v185 = vcvt.s32.f32 %v177
    %v186 = vcvt.s32.f32 %v178
    %v187 = vcvt.s32.f32 %v179
    %v188 = vcvt.s32.f32 %v180
    %v189 = vcvt.s32.f32 %v181
    %v190 = vshra.s32 %v28, 4
    %vm191 = vcmp.eq.s32.totalorder %v157, %v190
    %vm192 = vcmp.eq.s32.totalorder %v158, %v190
    %vm193 = vcmp.eq.s32.totalorder %v159, %v190
    %vm194 = vcmp.eq.s32.totalorder %v160, %v190
    %vm195 = vcmp.eq.s32.totalorder %v161, %v190
    %vm196 = vcmp.eq.s32.totalorder %v162, %v190
    %vm197 = vcmp.eq.s32.totalorder %v163, %v190
    %vm198 = vcmp.eq.s32.totalorder %v164, %v190
    %v199 = vsel %vm191, 1, 0
    %v200 = vsel %vm192, 1, 0
    %v201 = vsel %vm193, 1, 0
    %v202 = vsel %vm194, 1, 0
    %v203 = vsel %vm195, 1, 0
    %v204 = vsel %vm196, 1, 0
    %v205 = vsel %vm197, 1, 0
    %v206 = vsel %vm198, 1, 0
    %v207 = vcvt.s32.f32 %v199
    %v208 = vcvt.s32.f32 %v200
    %v209 = vcvt.s32.f32 %v201
    %v210 = vcvt.s32.f32 %v202
    %v211 = vcvt.s32.f32 %v203
    %v212 = vcvt.s32.f32 %v204
    %v213 = vcvt.s32.f32 %v205
    %v214 = vcvt.s32.f32 %v206
    %v215 = vld [vmem:[#allocation2 + $0x78] sm:$0xff]
    %v216 = vld [vmem:[#allocation2 + $0x80] sm:$0xff]
    %v217 = vld [vmem:[#allocation2 + $0x88] sm:$0xff]
    %v218 = vld [vmem:[#allocation2 + $0x90] sm:$0xff]
    %v219 = vld [vmem:[#allocation2 + $0x98] sm:$0xff]
    %v220 = vld [vmem:[#allocation2 + $0xa0] sm:$0xff]
    %v221 = vld [vmem:[#allocation2 + $0xa8] sm:$0xff]
    %v222 = vld [vmem:[#allocation2 + $0xb0] sm:$0xff]
    %v223 = vld [vmem:[#allocation2 + $0xb8] sm:$0xff]
    %v224 = vld [vmem:[#allocation2 + $0xc0] sm:$0xff]
    %v225 = vld [vmem:[#allocation2 + $0xc8] sm:$0xff]
    %v226 = vld [vmem:[#allocation2 + $0xd0] sm:$0xff]
    %v227 = vld [vmem:[#allocation2 + $0xd8] sm:$0xff]
    %v228 = vld [vmem:[#allocation2 + $0xe0] sm:$0xff]
    %v229 = vld [vmem:[#allocation2 + $0xe8] sm:$0xff]
    %v230 = vld [vmem:[#allocation2 + $0xf0] sm:$0xff]
    %v231 = vld [vmem:[#allocation2 + $0xf8] sm:$0xff]
    %v232 = vlaneseq
    %v233 = vshrl.u32 %v232, 7
    %v234 = vsub.s32 0, %v233
    %v235 = vrot.slane %v231, %v234
    %vm236 = vcmask 261120
    %v238 = vsel %vm236, %v125, 0
    %v241 = vsel %vm236, %v130, 0
    %243 = vmatprep.subr.mxu0 0.0
    %244 = vmatpush1.msra.mxu0 0.0
    %245 = vmatprep.subr.mxu0 0.0
    %246 = vmatpush1.msra.mxu0 0.0
    %247 = vmatprep.subr.mxu0 0.0
    %248 = vmatpush1.msra.mxu0 0.0
    %249 = vmatprep.subr.mxu0 0.0
    %250 = vmatpush1.msra.mxu0 0.0
    %251 = vmatprep.subr.mxu0 0.0
    %252 = vmatpush1.msra.mxu0 0.0
    %253 = vmatprep.subr.mxu0 0.0
    %254 = vmatpush1.msra.mxu0 0.0
    %255 = vmatprep.subr.mxu0 0.0
    %256 = vmatpush1.msra.mxu0 0.0
    %257 = vmatprep.subr.mxu0 0.0
    %258 = vmatpush1.msra.mxu0 0.0
    %259 = vmatprep.subr.mxu0 0.0
    %260 = vmatpush1.msra.mxu0 0.0
    %261 = vmatprep.subr.mxu0 0.0
    %262 = vmatpush1.msra.mxu0 0.0
    %263 = vmatprep.subr.mxu0 0.0
    %264 = vmatpush1.msra.mxu0 0.0
    %265 = vmatprep.subr.mxu0 0.0
    %266 = vmatpush1.msra.mxu0 0.0
    %267 = vmatprep.subr.mxu0 0.0
    %268 = vmatpush1.msra.mxu0 %v218
    %269 = vmatprep.subr.mxu0 0.0
    %270 = vmatpush1.msra.mxu0 %v217
    %271 = vmatprep.subr.mxu0 0.0
    %272 = vmatpush1.msra.mxu0 %v216
    %273 = vmatprep.subr.mxu0 0.0
    %274 = vmatpush1.msra.mxu0 %v215
    %275 = vmatprep.subr.mxu0 0.0
    %276 = vmatpush2.msra.mxu0 0.0
    %277 = vmatprep.subr.mxu0 0.0
    %278 = vmatpush2.msra.mxu0 0.0
    %279 = vmatprep.subr.mxu0 0.0
    %280 = vmatpush2.msra.mxu0 0.0
    %281 = vmatprep.subr.mxu0 0.0
    %282 = vmatpush2.msra.mxu0 0.0
    %283 = vmatprep.subr.mxu0 0.0
    %284 = vmatpush2.msra.mxu0 0.0
    %285 = vmatprep.subr.mxu0 0.0
    %286 = vmatpush2.msra.mxu0 0.0
    %287 = vmatprep.subr.mxu0 0.0
    %288 = vmatpush2.msra.mxu0 0.0
    %289 = vmatprep.subr.mxu0 0.0
    %290 = vmatpush2.msra.mxu0 0.0
    %291 = vmatprep.subr.mxu0 0.0
    %292 = vmatpush2.msra.mxu0 0.0
    %293 = vmatprep.subr.mxu0 0.0
    %294 = vmatpush2.msra.mxu0 0.0
    %295 = vmatprep.subr.mxu0 0.0
    %296 = vmatpush2.msra.mxu0 0.0
    %297 = vmatprep.subr.mxu0 0.0
    %298 = vmatpush2.msra.mxu0 0.0
    %299 = vmatprep.subr.mxu0 0.0
    %300 = vmatpush2.msra.mxu0 0.0
    %301 = vmatprep.subr.mxu0 0.0
    %302 = vmatpush2.msra.mxu0 0.0
    %303 = vmatprep.subr.mxu0 0.0
    %304 = vmatpush2.msra.mxu0 0.0
    %305 = vmatprep.subr.mxu0 0.0
    %306 = vmatpush2.msra.mxu0 0.0
    %307 = vmatprep.mubr.f32.mxu0 0.0
    %308 = vmatmul.mubr.f32.gmra.mxu0 %v238
    %v309 = vpop.f32.mrf.mxu0
    %v310 = vadd.f32 %v235, %v309
    %v311 = vpop.f32.mrf.mxu0
    %312 = vmatprep.mubr.f32.mxu0 0.0
    %313 = vmatmul.mubr.f32.gmra.mxu0 %v241
    %v314 = vpop.f32.mrf.mxu0
    %v315 = vadd.f32 %v235, %v314
    %v316 = vpop.f32.mrf.mxu0
    %317 = vdwg.mxu0
    %326 = vrot.lane.b32.xlu0 %v182, 32
    %v327 = vpop.permute.xlu0 %326
    %328 = vrot.lane.b32.xlu0 %v183, 32
    %v329 = vpop.permute.xlu0 %328
    %330 = vrot.lane.b32.xlu0 %v184, 32
    %v331 = vpop.permute.xlu0 %330
    %332 = vrot.lane.b32.xlu0 %v185, 32
    %v333 = vpop.permute.xlu0 %332
    %334 = vrot.lane.b32.xlu0 %v186, 32
    %v335 = vpop.permute.xlu0 %334
    %336 = vrot.lane.b32.xlu0 %v187, 32
    %v337 = vpop.permute.xlu0 %336
    %338 = vrot.lane.b32.xlu0 %v188, 32
    %v339 = vpop.permute.xlu0 %338
    %340 = vrot.lane.b32.xlu0 %v189, 32
    %v341 = vpop.permute.xlu0 %340
    %v350 = vmul.f32 %v310, %v327
    %v351 = vmul.f32 %v315, %v329
    %v352 = vmul.f32 %v310, %v331
    %v353 = vmul.f32 %v315, %v333
    %v354 = vmul.f32 %v310, %v335
    %v355 = vmul.f32 %v315, %v337
    %v356 = vmul.f32 %v310, %v339
    %v357 = vmul.f32 %v315, %v341
    %358 = vrot.lane.b32.xlu0 %v182, 64
    %v359 = vpop.permute.xlu0 %358
    %360 = vrot.lane.b32.xlu0 %v183, 64
    %v361 = vpop.permute.xlu0 %360
    %362 = vrot.lane.b32.xlu0 %v184, 64
    %v363 = vpop.permute.xlu0 %362
    %364 = vrot.lane.b32.xlu0 %v185, 64
    %v365 = vpop.permute.xlu0 %364
    %366 = vrot.lane.b32.xlu0 %v186, 64
    %v367 = vpop.permute.xlu0 %366
    %368 = vrot.lane.b32.xlu0 %v187, 64
    %v369 = vpop.permute.xlu0 %368
    %370 = vrot.lane.b32.xlu0 %v188, 64
    %v371 = vpop.permute.xlu0 %370
    %372 = vrot.lane.b32.xlu0 %v189, 64
    %v373 = vpop.permute.xlu0 %372
    %v382 = vmul.f32 %v310, %v359
    %v383 = vmul.f32 %v315, %v361
    %v384 = vmul.f32 %v310, %v363
    %v385 = vmul.f32 %v315, %v365
    %v386 = vmul.f32 %v310, %v367
    %v387 = vmul.f32 %v315, %v369
    %v388 = vmul.f32 %v310, %v371
    %v389 = vmul.f32 %v315, %v373
    %398 = vrot.lane.b32.xlu0 %v350, 96
    %v399 = vpop.permute.xlu0 %398
    %400 = vrot.lane.b32.xlu0 %v351, 96
    %v401 = vpop.permute.xlu0 %400
    %402 = vrot.lane.b32.xlu0 %v352, 96
    %v403 = vpop.permute.xlu0 %402
    %404 = vrot.lane.b32.xlu0 %v353, 96
    %v405 = vpop.permute.xlu0 %404
    %406 = vrot.lane.b32.xlu0 %v354, 96
    %v407 = vpop.permute.xlu0 %406
    %408 = vrot.lane.b32.xlu0 %v355, 96
    %v409 = vpop.permute.xlu0 %408
    %410 = vrot.lane.b32.xlu0 %v356, 96
    %v411 = vpop.permute.xlu0 %410
    %412 = vrot.lane.b32.xlu0 %v357, 96
    %v413 = vpop.permute.xlu0 %412
    %v415 = vsel %vm236, %v310, 0
    %v418 = vsel %vm236, %v315, 0
    %v420 = vsel %vm236, %v399, 0
    %v422 = vsel %vm236, %v401, 0
    %v424 = vsel %vm236, %v403, 0
    %v426 = vsel %vm236, %v405, 0
    %v428 = vsel %vm236, %v407, 0
    %v430 = vsel %vm236, %v409, 0
    %v432 = vsel %vm236, %v411, 0
    %v434 = vsel %vm236, %v413, 0
    %436 = vmatprep.subr.mxu0 0.0
    %437 = vmatpush1.xpose.msra.mxu0 0.0
    %438 = vmatprep.subr.mxu0 0.0
    %439 = vmatpush1.xpose.msra.mxu0 0.0
    %440 = vmatprep.subr.mxu0 0.0
    %441 = vmatpush1.xpose.msra.mxu0 0.0
    %442 = vmatprep.subr.mxu0 0.0
    %443 = vmatpush1.xpose.msra.mxu0 0.0
    %444 = vmatprep.subr.mxu0 0.0
    %445 = vmatpush1.xpose.msra.mxu0 0.0
    %446 = vmatprep.subr.mxu0 0.0
    %447 = vmatpush1.xpose.msra.mxu0 0.0
    %448 = vmatprep.subr.mxu0 0.0
    %449 = vmatpush1.xpose.msra.mxu0 0.0
    %450 = vmatprep.subr.mxu0 0.0
    %451 = vmatpush1.xpose.msra.mxu0 0.0
    %452 = vmatprep.subr.mxu0 0.0
    %453 = vmatpush1.xpose.msra.mxu0 %v434
    %454 = vmatprep.subr.mxu0 0.0
    %455 = vmatpush1.xpose.msra.mxu0 %v432
    %456 = vmatprep.subr.mxu0 0.0
    %457 = vmatpush1.xpose.msra.mxu0 %v430
    %458 = vmatprep.subr.mxu0 0.0
    %459 = vmatpush1.xpose.msra.mxu0 %v428
    %460 = vmatprep.subr.mxu0 0.0
    %461 = vmatpush1.xpose.msra.mxu0 %v426
    %462 = vmatprep.subr.mxu0 0.0
    %463 = vmatpush1.xpose.msra.mxu0 %v424
    %464 = vmatprep.subr.mxu0 0.0
    %465 = vmatpush1.xpose.msra.mxu0 %v422
    %466 = vmatprep.subr.mxu0 0.0
    %467 = vmatpush1.xpose.msra.mxu0 %v420
    %468 = vmatprep.subr.mxu0 0.0
    %469 = vmatpush2.xpose.msra.mxu0 0.0
    %470 = vmatprep.subr.mxu0 0.0
    %471 = vmatpush2.xpose.msra.mxu0 0.0
    %472 = vmatprep.subr.mxu0 0.0
    %473 = vmatpush2.xpose.msra.mxu0 0.0
    %474 = vmatprep.subr.mxu0 0.0
    %475 = vmatpush2.xpose.msra.mxu0 0.0
    %476 = vmatprep.subr.mxu0 0.0
    %477 = vmatpush2.xpose.msra.mxu0 0.0
    %478 = vmatprep.subr.mxu0 0.0
    %479 = vmatpush2.xpose.msra.mxu0 0.0
    %480 = vmatprep.subr.mxu0 0.0
    %481 = vmatpush2.xpose.msra.mxu0 0.0
    %482 = vmatprep.subr.mxu0 0.0
    %483 = vmatpush2.xpose.msra.mxu0 0.0
    %484 = vmatprep.subr.mxu0 0.0
    %485 = vmatpush2.xpose.msra.mxu0 0.0
    %486 = vmatprep.subr.mxu0 0.0
    %487 = vmatpush2.xpose.msra.mxu0 0.0
    %488 = vmatprep.subr.mxu0 0.0
    %489 = vmatpush2.xpose.msra.mxu0 0.0
    %490 = vmatprep.subr.mxu0 0.0
    %491 = vmatpush2.xpose.msra.mxu0 0.0
    %492 = vmatprep.subr.mxu0 0.0
    %493 = vmatpush2.xpose.msra.mxu0 0.0
    %494 = vmatprep.subr.mxu0 0.0
    %495 = vmatpush2.xpose.msra.mxu0 0.0
    %496 = vmatprep.subr.mxu0 0.0
    %497 = vmatpush2.xpose.msra.mxu0 0.0
    %498 = vmatprep.subr.mxu0 0.0
    %499 = vmatpush2.xpose.msra.mxu0 0.0
    %500 = vmatprep.mubr.f32.mxu0 0.0
    %501 = vmatmul.mubr.f32.gmra.mxu0 %v415
    %v502 = vpop.f32.mrf.mxu0
    %v503 = vadd.f32 0.0, %v502
    %v504 = vpop.f32.mrf.mxu0
    %505 = vmatprep.mubr.f32.mxu0 0.0
    %506 = vmatmul.mubr.f32.gmra.mxu0 %v418
    %v507 = vpop.f32.mrf.mxu0
    %v508 = vadd.f32 0.0, %v507
    %v509 = vpop.f32.mrf.mxu0
    %510 = vdwg.mxu0
    %v511 = vmul.f32 %v503, 0.35355338
    %v512 = vmul.f32 %v508, 0.35355338
    %v513 = vadd.f32 %v511, %v149
    %v514 = vadd.f32 %v512, %v150
    %v515 = vsel %vm51, %v513, -inf
    %516 = vmax.xlane.f32.xlu0 %v515
    %v517 = vpop.xlane.xlu0 %516
    %v518 = vsel %vm51, %v514, -inf
    %519 = vmax.xlane.f32.xlu0 %v518
    %v520 = vpop.xlane.xlu0 %519
    %v521 = vsub.f32 %v513, %v517
    %v522 = vsub.f32 %v514, %v520
    %v523 = vmul.f32 %v521, 1.442695
    %v524 = vpow.pop %v523
    %v525 = vmul.f32 %v522, 1.442695
    %v526 = vpow.pop %v525
    %v528 = vsel %vm51, %v524, 0
    %v531 = vsel %vm51, %v526, 0
    %533 = vmatprep.subr.mxu0 0.0
    %534 = vmatpush1.msra.mxu0 0.0
    %535 = vmatprep.subr.mxu0 0.0
    %536 = vmatpush1.msra.mxu0 0.0
    %537 = vmatprep.subr.mxu0 0.0
    %538 = vmatpush1.msra.mxu0 0.0
    %539 = vmatprep.subr.mxu0 0.0
    %540 = vmatpush1.msra.mxu0 0.0
    %541 = vmatprep.subr.mxu0 0.0
    %542 = vmatpush1.msra.mxu0 0.0
    %543 = vmatprep.subr.mxu0 0.0
    %544 = vmatpush1.msra.mxu0 0.0
    %545 = vmatprep.subr.mxu0 0.0
    %546 = vmatpush1.msra.mxu0 0.0
    %547 = vmatprep.subr.mxu0 0.0
    %548 = vmatpush1.msra.mxu0 0.0
    %549 = vmatprep.subr.mxu0 0.0
    %550 = vmatpush1.msra.mxu0 %v214
    %551 = vmatprep.subr.mxu0 0.0
    %552 = vmatpush1.msra.mxu0 %v213
    %553 = vmatprep.subr.mxu0 0.0
    %554 = vmatpush1.msra.mxu0 %v212
    %555 = vmatprep.subr.mxu0 0.0
    %556 = vmatpush1.msra.mxu0 %v211
    %557 = vmatprep.subr.mxu0 0.0
    %558 = vmatpush1.msra.mxu0 %v210
    %559 = vmatprep.subr.mxu0 0.0
    %560 = vmatpush1.msra.mxu0 %v209
    %561 = vmatprep.subr.mxu0 0.0
    %562 = vmatpush1.msra.mxu0 %v208
    %563 = vmatprep.subr.mxu0 0.0
    %564 = vmatpush1.msra.mxu0 %v207
    %565 = vmatprep.subr.mxu0 0.0
    %566 = vmatpush2.msra.mxu0 0.0
    %567 = vmatprep.subr.mxu0 0.0
    %568 = vmatpush2.msra.mxu0 0.0
    %569 = vmatprep.subr.mxu0 0.0
    %570 = vmatpush2.msra.mxu0 0.0
    %571 = vmatprep.subr.mxu0 0.0
    %572 = vmatpush2.msra.mxu0 0.0
    %573 = vmatprep.subr.mxu0 0.0
    %574 = vmatpush2.msra.mxu0 0.0
    %575 = vmatprep.subr.mxu0 0.0
    %576 = vmatpush2.msra.mxu0 0.0
    %577 = vmatprep.subr.mxu0 0.0
    %578 = vmatpush2.msra.mxu0 0.0
    %579 = vmatprep.subr.mxu0 0.0
    %580 = vmatpush2.msra.mxu0 0.0
    %581 = vmatprep.subr.mxu0 0.0
    %582 = vmatpush2.msra.mxu0 0.0
    %583 = vmatprep.subr.mxu0 0.0
    %584 = vmatpush2.msra.mxu0 0.0
    %585 = vmatprep.subr.mxu0 0.0
    %586 = vmatpush2.msra.mxu0 0.0
    %587 = vmatprep.subr.mxu0 0.0
    %588 = vmatpush2.msra.mxu0 0.0
    %589 = vmatprep.subr.mxu0 0.0
    %590 = vmatpush2.msra.mxu0 0.0
    %591 = vmatprep.subr.mxu0 0.0
    %592 = vmatpush2.msra.mxu0 0.0
    %593 = vmatprep.subr.mxu0 0.0
    %594 = vmatpush2.msra.mxu0 0.0
    %595 = vmatprep.subr.mxu0 0.0
    %596 = vmatpush2.msra.mxu0 0.0
    %597 = vmatprep.mubr.f32.mxu0 0.0
    %598 = vmatmul.mubr.f32.gmra.mxu0 %v528
    %v599 = vpop.f32.mrf.mxu0
    %v600 = vadd.f32 0.0, %v599
    %v601 = vpop.f32.mrf.mxu0
    %602 = vmatprep.mubr.f32.mxu0 0.0
    %603 = vmatmul.mubr.f32.gmra.mxu0 %v531
    %v604 = vpop.f32.mrf.mxu0
    %v605 = vadd.f32 0.0, %v604
    %v606 = vpop.f32.mrf.mxu0
    %607 = vdwg.mxu0
    %v608 = vrcp.pop %v600
    %v609 = vrcp.pop %v605
    %v610 = vmul.f32 %v524, %v608
    %v611 = vmul.f32 %v526, %v609
    %620 = vrot.lane.b32.xlu0 %v382, 64
    %v621 = vpop.permute.xlu0 %620
    %622 = vrot.lane.b32.xlu0 %v383, 64
    %v623 = vpop.permute.xlu0 %622
    %624 = vrot.lane.b32.xlu0 %v384, 64
    %v625 = vpop.permute.xlu0 %624
    %626 = vrot.lane.b32.xlu0 %v385, 64
    %v627 = vpop.permute.xlu0 %626
    %628 = vrot.lane.b32.xlu0 %v386, 64
    %v629 = vpop.permute.xlu0 %628
    %630 = vrot.lane.b32.xlu0 %v387, 64
    %v631 = vpop.permute.xlu0 %630
    %632 = vrot.lane.b32.xlu0 %v388, 64
    %v633 = vpop.permute.xlu0 %632
    %634 = vrot.lane.b32.xlu0 %v389, 64
    %v635 = vpop.permute.xlu0 %634
    %v645 = vsel %vm51, %v610, 0
    %v648 = vsel %vm51, %v611, 0
    %650 = vmatprep.subr.mxu0 0.0
    %651 = vmatpush1.msra.mxu0 0.0
    %652 = vmatprep.subr.mxu0 0.0
    %653 = vmatpush1.msra.mxu0 0.0
    %654 = vmatprep.subr.mxu0 0.0
    %655 = vmatpush1.msra.mxu0 0.0
    %656 = vmatprep.subr.mxu0 0.0
    %657 = vmatpush1.msra.mxu0 0.0
    %658 = vmatprep.subr.mxu0 0.0
    %659 = vmatpush1.msra.mxu0 0.0
    %660 = vmatprep.subr.mxu0 0.0
    %661 = vmatpush1.msra.mxu0 0.0
    %662 = vmatprep.subr.mxu0 0.0
    %663 = vmatpush1.msra.mxu0 0.0
    %664 = vmatprep.subr.mxu0 0.0
    %665 = vmatpush1.msra.mxu0 0.0
    %666 = vmatprep.subr.mxu0 0.0
    %667 = vmatpush1.msra.mxu0 %v635
    %668 = vmatprep.subr.mxu0 0.0
    %669 = vmatpush1.msra.mxu0 %v633
    %670 = vmatprep.subr.mxu0 0.0
    %671 = vmatpush1.msra.mxu0 %v631
    %672 = vmatprep.subr.mxu0 0.0
    %673 = vmatpush1.msra.mxu0 %v629
    %674 = vmatprep.subr.mxu0 0.0
    %675 = vmatpush1.msra.mxu0 %v627
    %676 = vmatprep.subr.mxu0 0.0
    %677 = vmatpush1.msra.mxu0 %v625
    %678 = vmatprep.subr.mxu0 0.0
    %679 = vmatpush1.msra.mxu0 %v623
    %680 = vmatprep.subr.mxu0 0.0
    %681 = vmatpush1.msra.mxu0 %v621
    %682 = vmatprep.subr.mxu0 0.0
    %683 = vmatpush2.msra.mxu0 0.0
    %684 = vmatprep.subr.mxu0 0.0
    %685 = vmatpush2.msra.mxu0 0.0
    %686 = vmatprep.subr.mxu0 0.0
    %687 = vmatpush2.msra.mxu0 0.0
    %688 = vmatprep.subr.mxu0 0.0
    %689 = vmatpush2.msra.mxu0 0.0
    %690 = vmatprep.subr.mxu0 0.0
    %691 = vmatpush2.msra.mxu0 0.0
    %692 = vmatprep.subr.mxu0 0.0
    %693 = vmatpush2.msra.mxu0 0.0
    %694 = vmatprep.subr.mxu0 0.0
    %695 = vmatpush2.msra.mxu0 0.0
    %696 = vmatprep.subr.mxu0 0.0
    %697 = vmatpush2.msra.mxu0 0.0
    %698 = vmatprep.subr.mxu0 0.0
    %699 = vmatpush2.msra.mxu0 0.0
    %700 = vmatprep.subr.mxu0 0.0
    %701 = vmatpush2.msra.mxu0 0.0
    %702 = vmatprep.subr.mxu0 0.0
    %703 = vmatpush2.msra.mxu0 0.0
    %704 = vmatprep.subr.mxu0 0.0
    %705 = vmatpush2.msra.mxu0 0.0
    %706 = vmatprep.subr.mxu0 0.0
    %707 = vmatpush2.msra.mxu0 0.0
    %708 = vmatprep.subr.mxu0 0.0
    %709 = vmatpush2.msra.mxu0 0.0
    %710 = vmatprep.subr.mxu0 0.0
    %711 = vmatpush2.msra.mxu0 0.0
    %712 = vmatprep.subr.mxu0 0.0
    %713 = vmatpush2.msra.mxu0 0.0
    %714 = vmatprep.mubr.f32.mxu0 0.0
    %715 = vmatmul.mubr.f32.gmra.mxu0 %v645
    %v716 = vpop.f32.mrf.mxu0
    %v717 = vadd.f32 0.0, %v716
    %v718 = vpop.f32.mrf.mxu0
    %719 = vmatprep.mubr.f32.mxu0 0.0
    %720 = vmatmul.mubr.f32.gmra.mxu0 %v648
    %v721 = vpop.f32.mrf.mxu0
    %v722 = vadd.f32 0.0, %v721
    %v723 = vpop.f32.mrf.mxu0
    %724 = vdwg.mxu0
    %v725 = vlaneseq
    %v726 = vshrl.u32 %v725, 7
    %v727 = vsub.s32 1, %v726
    %v728 = vrot.slane %v231, %v727
    %v730 = vsel %vm236, %v717, 0
    %v733 = vsel %vm236, %v722, 0
    %735 = vmatprep.subr.mxu0 0.0
    %736 = vmatpush1.msra.mxu0 0.0
    %737 = vmatprep.subr.mxu0 0.0
    %738 = vmatpush1.msra.mxu0 0.0
    %739 = vmatprep.subr.mxu0 0.0
    %740 = vmatpush1.msra.mxu0 0.0
    %741 = vmatprep.subr.mxu0 0.0
    %742 = vmatpush1.msra.mxu0 0.0
    %743 = vmatprep.subr.mxu0 0.0
    %744 = vmatpush1.msra.mxu0 0.0
    %745 = vmatprep.subr.mxu0 0.0
    %746 = vmatpush1.msra.mxu0 0.0
    %747 = vmatprep.subr.mxu0 0.0
    %748 = vmatpush1.msra.mxu0 0.0
    %749 = vmatprep.subr.mxu0 0.0
    %750 = vmatpush1.msra.mxu0 0.0
    %751 = vmatprep.subr.mxu0 0.0
    %752 = vmatpush1.msra.mxu0 0.0
    %753 = vmatprep.subr.mxu0 0.0
    %754 = vmatpush1.msra.mxu0 0.0
    %755 = vmatprep.subr.mxu0 0.0
    %756 = vmatpush1.msra.mxu0 0.0
    %757 = vmatprep.subr.mxu0 0.0
    %758 = vmatpush1.msra.mxu0 0.0
    %759 = vmatprep.subr.mxu0 0.0
    %760 = vmatpush1.msra.mxu0 %v222
    %761 = vmatprep.subr.mxu0 0.0
    %762 = vmatpush1.msra.mxu0 %v221
    %763 = vmatprep.subr.mxu0 0.0
    %764 = vmatpush1.msra.mxu0 %v220
    %765 = vmatprep.subr.mxu0 0.0
    %766 = vmatpush1.msra.mxu0 %v219
    %767 = vmatprep.subr.mxu0 0.0
    %768 = vmatpush2.msra.mxu0 0.0
    %769 = vmatprep.subr.mxu0 0.0
    %770 = vmatpush2.msra.mxu0 0.0
    %771 = vmatprep.subr.mxu0 0.0
    %772 = vmatpush2.msra.mxu0 0.0
    %773 = vmatprep.subr.mxu0 0.0
    %774 = vmatpush2.msra.mxu0 0.0
    %775 = vmatprep.subr.mxu0 0.0
    %776 = vmatpush2.msra.mxu0 0.0
    %777 = vmatprep.subr.mxu0 0.0
    %778 = vmatpush2.msra.mxu0 0.0
    %779 = vmatprep.subr.mxu0 0.0
    %780 = vmatpush2.msra.mxu0 0.0
    %781 = vmatprep.subr.mxu0 0.0
    %782 = vmatpush2.msra.mxu0 0.0
    %783 = vmatprep.subr.mxu0 0.0
    %784 = vmatpush2.msra.mxu0 0.0
    %785 = vmatprep.subr.mxu0 0.0
    %786 = vmatpush2.msra.mxu0 0.0
    %787 = vmatprep.subr.mxu0 0.0
    %788 = vmatpush2.msra.mxu0 0.0
    %789 = vmatprep.subr.mxu0 0.0
    %790 = vmatpush2.msra.mxu0 0.0
    %791 = vmatprep.subr.mxu0 0.0
    %792 = vmatpush2.msra.mxu0 0.0
    %793 = vmatprep.subr.mxu0 0.0
    %794 = vmatpush2.msra.mxu0 0.0
    %795 = vmatprep.subr.mxu0 0.0
    %796 = vmatpush2.msra.mxu0 0.0
    %797 = vmatprep.subr.mxu0 0.0
    %798 = vmatpush2.msra.mxu0 0.0
    %799 = vmatprep.mubr.f32.mxu0 0.0
    %800 = vmatmul.mubr.f32.gmra.mxu0 %v730
    %v801 = vpop.f32.mrf.mxu0
    %v802 = vadd.f32 %v728, %v801
    %v803 = vpop.f32.mrf.mxu0
    %804 = vmatprep.mubr.f32.mxu0 0.0
    %805 = vmatmul.mubr.f32.gmra.mxu0 %v733
    %v806 = vpop.f32.mrf.mxu0
    %v807 = vadd.f32 %v728, %v806
    %v808 = vpop.f32.mrf.mxu0
    %809 = vdwg.mxu0
    %v810 = vadd.f32 %v802, %v125
    %v811 = vadd.f32 %v807, %v130
    %v812 = vsel %vm236, %v810, 0.0
    %813 = vadd.xlane.f32.xlu0 %v812
    %v814 = vpop.xlane.xlu0 %813
    %v815 = vsel %vm236, %v811, 0.0
    %816 = vadd.xlane.f32.xlu0 %v815
    %v817 = vpop.xlane.xlu0 %816
    %v818 = vrcp.pop 32.0
    %v819 = vmul.f32 %v814, %v818
    %v820 = vmul.f32 %v817, %v818
    %v821 = vsub.f32 %v810, %v819
    %v822 = vsub.f32 %v811, %v820
    %v823 = vmul.f32 %v821, %v821
    %v824 = vmul.f32 %v822, %v822
    %v825 = vsel %vm236, %v823, 0.0
    %826 = vadd.xlane.f32.xlu0 %v825
    %v827 = vpop.xlane.xlu0 %826
    %v828 = vsel %vm236, %v824, 0.0
    %829 = vadd.xlane.f32.xlu0 %v828
    %v830 = vpop.xlane.xlu0 %829
    %v831 = vmul.f32 %v827, %v818
    %v832 = vmul.f32 %v830, %v818
    %v833 = vadd.f32 %v831, 1e-05
    %v834 = vadd.f32 %v832, 1e-05
    %v835 = vrsqrt.pop %v833
    %v836 = vrsqrt.pop %v834
    %v837 = vmul.f32 %v821, %v835
    %v838 = vmul.f32 %v822, %v836
    %v839 = vlaneseq
    %v840 = vshrl.u32 %v839, 7
    %v841 = vsub.s32 2, %v840
    %v842 = vrot.slane %v231, %v841
    %v843 = vmul.f32 %v837, %v842
    %v844 = vmul.f32 %v838, %v842
    %v845 = vlaneseq
    %v846 = vshrl.u32 %v845, 7
    %v847 = vsub.s32 3, %v846
    %v848 = vrot.slane %v231, %v847
    %v849 = vadd.f32 %v843, %v848
    %v850 = vadd.f32 %v844, %v848
    %v851 = vlaneseq
    %v852 = vshrl.u32 %v851, 7
    %v853 = vsub.s32 6, %v852
    %v854 = vrot.slane %v231, %v853
    %v856 = vsel %vm236, %v849, 0
    %v859 = vsel %vm236, %v850, 0
    %861 = vmatprep.subr.mxu0 0.0
    %862 = vmatpush1.msra.mxu0 0.0
    %863 = vmatprep.subr.mxu0 0.0
    %864 = vmatpush1.msra.mxu0 0.0
    %865 = vmatprep.subr.mxu0 0.0
    %866 = vmatpush1.msra.mxu0 0.0
    %867 = vmatprep.subr.mxu0 0.0
    %868 = vmatpush1.msra.mxu0 0.0
    %869 = vmatprep.subr.mxu0 0.0
    %870 = vmatpush1.msra.mxu0 0.0
    %871 = vmatprep.subr.mxu0 0.0
    %872 = vmatpush1.msra.mxu0 0.0
    %873 = vmatprep.subr.mxu0 0.0
    %874 = vmatpush1.msra.mxu0 0.0
    %875 = vmatprep.subr.mxu0 0.0
    %876 = vmatpush1.msra.mxu0 0.0
    %877 = vmatprep.subr.mxu0 0.0
    %878 = vmatpush1.msra.mxu0 0.0
    %879 = vmatprep.subr.mxu0 0.0
    %880 = vmatpush1.msra.mxu0 0.0
    %881 = vmatprep.subr.mxu0 0.0
    %882 = vmatpush1.msra.mxu0 0.0
    %883 = vmatprep.subr.mxu0 0.0
    %884 = vmatpush1.msra.mxu0 0.0
    %885 = vmatprep.subr.mxu0 0.0
    %886 = vmatpush1.msra.mxu0 %v226
    %887 = vmatprep.subr.mxu0 0.0
    %888 = vmatpush1.msra.mxu0 %v225
    %889 = vmatprep.subr.mxu0 0.0
    %890 = vmatpush1.msra.mxu0 %v224
    %891 = vmatprep.subr.mxu0 0.0
    %892 = vmatpush1.msra.mxu0 %v223
    %893 = vmatprep.subr.mxu0 0.0
    %894 = vmatpush2.msra.mxu0 0.0
    %895 = vmatprep.subr.mxu0 0.0
    %896 = vmatpush2.msra.mxu0 0.0
    %897 = vmatprep.subr.mxu0 0.0
    %898 = vmatpush2.msra.mxu0 0.0
    %899 = vmatprep.subr.mxu0 0.0
    %900 = vmatpush2.msra.mxu0 0.0
    %901 = vmatprep.subr.mxu0 0.0
    %902 = vmatpush2.msra.mxu0 0.0
    %903 = vmatprep.subr.mxu0 0.0
    %904 = vmatpush2.msra.mxu0 0.0
    %905 = vmatprep.subr.mxu0 0.0
    %906 = vmatpush2.msra.mxu0 0.0
    %907 = vmatprep.subr.mxu0 0.0
    %908 = vmatpush2.msra.mxu0 0.0
    %909 = vmatprep.subr.mxu0 0.0
    %910 = vmatpush2.msra.mxu0 0.0
    %911 = vmatprep.subr.mxu0 0.0
    %912 = vmatpush2.msra.mxu0 0.0
    %913 = vmatprep.subr.mxu0 0.0
    %914 = vmatpush2.msra.mxu0 0.0
    %915 = vmatprep.subr.mxu0 0.0
    %916 = vmatpush2.msra.mxu0 0.0
    %917 = vmatprep.subr.mxu0 0.0
    %918 = vmatpush2.msra.mxu0 0.0
    %919 = vmatprep.subr.mxu0 0.0
    %920 = vmatpush2.msra.mxu0 0.0
    %921 = vmatprep.subr.mxu0 0.0
    %922 = vmatpush2.msra.mxu0 0.0
    %923 = vmatprep.subr.mxu0 0.0
    %924 = vmatpush2.msra.mxu0 0.0
    %925 = vmatprep.mubr.f32.mxu0 0.0
    %926 = vmatmul.mubr.f32.gmra.mxu0 %v856
    %v927 = vpop.f32.mrf.mxu0
    %v928 = vadd.f32 %v854, %v927
    %v929 = vpop.f32.mrf.mxu0
    %930 = vmatprep.mubr.f32.mxu0 0.0
    %931 = vmatmul.mubr.f32.gmra.mxu0 %v859
    %v932 = vpop.f32.mrf.mxu0
    %v933 = vadd.f32 %v854, %v932
    %v934 = vpop.f32.mrf.mxu0
    %935 = vdwg.mxu0
    %v936 = vmax.f32 %v928, 0.0
    %v937 = vmax.f32 %v933, 0.0
    %v938 = vlaneseq
    %v939 = vshrl.u32 %v938, 7
    %v940 = vsub.s32 7, %v939
    %v941 = vrot.slane %v231, %v940
    %942 = vmatprep.subr.mxu0 0.0
    %943 = vmatpush1.xpose.msra.mxu0 0.0
    %944 = vmatprep.subr.mxu0 0.0
    %945 = vmatpush1.xpose.msra.mxu0 0.0
    %946 = vmatprep.subr.mxu0 0.0
    %947 = vmatpush1.xpose.msra.mxu0 0.0
    %948 = vmatprep.subr.mxu0 0.0
    %949 = vmatpush1.xpose.msra.mxu0 0.0
    %950 = vmatprep.subr.mxu0 0.0
    %951 = vmatpush1.xpose.msra.mxu0 0.0
    %952 = vmatprep.subr.mxu0 0.0
    %953 = vmatpush1.xpose.msra.mxu0 0.0
    %954 = vmatprep.subr.mxu0 0.0
    %955 = vmatpush1.xpose.msra.mxu0 0.0
    %956 = vmatprep.subr.mxu0 0.0
    %957 = vmatpush1.xpose.msra.mxu0 0.0
    %958 = vmatprep.subr.mxu0 0.0
    %959 = vmatpush1.xpose.msra.mxu0 0.0
    %960 = vmatprep.subr.mxu0 0.0
    %961 = vmatpush1.xpose.msra.mxu0 0.0
    %962 = vmatprep.subr.mxu0 0.0
    %963 = vmatpush1.xpose.msra.mxu0 0.0
    %964 = vmatprep.subr.mxu0 0.0
    %965 = vmatpush1.xpose.msra.mxu0 0.0
    %966 = vmatprep.subr.mxu0 0.0
    %967 = vmatpush1.xpose.msra.mxu0 %v230
    %968 = vmatprep.subr.mxu0 0.0
    %969 = vmatpush1.xpose.msra.mxu0 %v229
    %970 = vmatprep.subr.mxu0 0.0
    %971 = vmatpush1.xpose.msra.mxu0 %v228
    %972 = vmatprep.subr.mxu0 0.0
    %973 = vmatpush1.xpose.msra.mxu0 %v227
    %974 = vmatprep.subr.mxu0 0.0
    %975 = vmatpush2.xpose.msra.mxu0 0.0
    %976 = vmatprep.subr.mxu0 0.0
    %977 = vmatpush2.xpose.msra.mxu0 0.0
    %978 = vmatprep.subr.mxu0 0.0
    %979 = vmatpush2.xpose.msra.mxu0 0.0
    %980 = vmatprep.subr.mxu0 0.0
    %981 = vmatpush2.xpose.msra.mxu0 0.0
    %982 = vmatprep.subr.mxu0 0.0
    %983 = vmatpush2.xpose.msra.mxu0 0.0
    %984 = vmatprep.subr.mxu0 0.0
    %985 = vmatpush2.xpose.msra.mxu0 0.0
    %986 = vmatprep.subr.mxu0 0.0
    %987 = vmatpush2.xpose.msra.mxu0 0.0
    %988 = vmatprep.subr.mxu0 0.0
    %989 = vmatpush2.xpose.msra.mxu0 0.0
    %990 = vmatprep.subr.mxu0 0.0
    %991 = vmatpush2.xpose.msra.mxu0 0.0
    %992 = vmatprep.subr.mxu0 0.0
    %993 = vmatpush2.xpose.msra.mxu0 0.0
    %994 = vmatprep.subr.mxu0 0.0
    %995 = vmatpush2.xpose.msra.mxu0 0.0
    %996 = vmatprep.subr.mxu0 0.0
    %997 = vmatpush2.xpose.msra.mxu0 0.0
    %998 = vmatprep.subr.mxu0 0.0
    %999 = vmatpush2.xpose.msra.mxu0 0.0
    %1000 = vmatprep.subr.mxu0 0.0
    %1001 = vmatpush2.xpose.msra.mxu0 0.0
    %1002 = vmatprep.subr.mxu0 0.0
    %1003 = vmatpush2.xpose.msra.mxu0 0.0
    %1004 = vmatprep.subr.mxu0 0.0
    %1005 = vmatpush2.xpose.msra.mxu0 0.0
    %1006 = vmatprep.mubr.f32.mxu0 0.0
    %1007 = vmatmul.mubr.f32.gmra.mxu0 %v936
    %v1008 = vpop.f32.mrf.mxu0
    %v1009 = vadd.f32 %v941, %v1008
    %v1010 = vpop.f32.mrf.mxu0
    %1011 = vmatprep.mubr.f32.mxu0 0.0
    %1012 = vmatmul.mubr.f32.gmra.mxu0 %v937
    %v1013 = vpop.f32.mrf.mxu0
    %v1014 = vadd.f32 %v941, %v1013
    %v1015 = vpop.f32.mrf.mxu0
    %1016 = vdwg.mxu0
    %v1017 = vadd.f32 %v1009, %v849
    %v1018 = vadd.f32 %v1014, %v850
    %v1019 = vsel %vm236, %v1017, 0.0
    %1020 = vadd.xlane.f32.xlu0 %v1019
    %v1021 = vpop.xlane.xlu0 %1020
    %v1022 = vsel %vm236, %v1018, 0.0
    %1023 = vadd.xlane.f32.xlu0 %v1022
    %v1024 = vpop.xlane.xlu0 %1023
    %v1025 = vmul.f32 %v1021, %v818
    %v1026 = vmul.f32 %v1024, %v818
    %v1027 = vsub.f32 %v1017, %v1025
    %v1028 = vsub.f32 %v1018, %v1026
    %v1029 = vmul.f32 %v1027, %v1027
    %v1030 = vmul.f32 %v1028, %v1028
    %v1031 = vsel %vm236, %v1029, 0.0
    %1032 = vadd.xlane.f32.xlu0 %v1031
    %v1033 = vpop.xlane.xlu0 %1032
    %v1034 = vsel %vm236, %v1030, 0.0
    %1035 = vadd.xlane.f32.xlu0 %v1034
    %v1036 = vpop.xlane.xlu0 %1035
    %v1037 = vmul.f32 %v1033, %v818
    %v1038 = vmul.f32 %v1036, %v818
    %v1039 = vadd.f32 %v1037, 1e-05
    %v1040 = vadd.f32 %v1038, 1e-05
    %v1041 = vrsqrt.pop %v1039
    %v1042 = vrsqrt.pop %v1040
    %v1043 = vmul.f32 %v1027, %v1041
    %v1044 = vmul.f32 %v1028, %v1042
    %v1045 = vlaneseq
    %v1046 = vshrl.u32 %v1045, 7
    %v1047 = vsub.s32 4, %v1046
    %v1048 = vrot.slane %v231, %v1047
    %v1049 = vmul.f32 %v1043, %v1048
    %v1050 = vmul.f32 %v1044, %v1048
    %v1051 = vlaneseq
    %v1052 = vshrl.u32 %v1051, 7
    %v1053 = vsub.s32 5, %v1052
    %v1054 = vrot.slane %v231, %v1053
    %v1055 = vadd.f32 %v1049, %v1054
    %v1056 = vadd.f32 %v1050, %v1054
    %v1057 = vld [vmem:[#allocation2 + $0x100] sm:$0xff]
    %v1058 = vld [vmem:[#allocation2 + $0x108] sm:$0xff]
    %v1059 = vld [vmem:[#allocation2 + $0x110] sm:$0xff]
    %v1060 = vld [vmem:[#allocation2 + $0x118] sm:$0xff]
    %v1061 = vld [vmem:[#allocation2 + $0x120] sm:$0xff]
    %v1062 = vld [vmem:[#allocation2 + $0x128] sm:$0xff]
    %v1063 = vld [vmem:[#allocation2 + $0x130] sm:$0xff]
    %v1064 = vld [vmem:[#allocation2 + $0x138] sm:$0xff]
    %v1065 = vld [vmem:[#allocation2 + $0x140] sm:$0xff]
    %v1066 = vld [vmem:[#allocation2 + $0x148] sm:$0xff]
    %v1067 = vld [vmem:[#allocation2 + $0x150] sm:$0xff]
    %v1068 = vld [vmem:[#allocation2 + $0x158] sm:$0xff]
    %v1069 = vld [vmem:[#allocation2 + $0x160] sm:$0xff]
    %v1070 = vld [vmem:[#allocation2 + $0x168] sm:$0xff]
    %v1071 = vld [vmem:[#allocation2 + $0x170] sm:$0xff]
    %v1072 = vld [vmem:[#allocation2 + $0x178] sm:$0xff]
    %v1073 = vld [vmem:[#allocation2 + $0x180] sm:$0xff]
    %v1074 = vlaneseq
    %v1075 = vshrl.u32 %v1074, 7
    %v1076 = vsub.s32 0, %v1075
    %v1077 = vrot.slane %v1073, %v1076
    %v1079 = vsel %vm236, %v1055, 0
    %v1082 = vsel %vm236, %v1056, 0
    %1084 = vmatprep.subr.mxu0 0.0
    %1085 = vmatpush1.msra.mxu0 0.0
    %1086 = vmatprep.subr.mxu0 0.0
    %1087 = vmatpush1.msra.mxu0 0.0
    %1088 = vmatprep.subr.mxu0 0.0
    %1089 = vmatpush1.msra.mxu0 0.0
    %1090 = vmatprep.subr.mxu0 0.0
    %1091 = vmatpush1.msra.mxu0 0.0
    %1092 = vmatprep.subr.mxu0 0.0
    %1093 = vmatpush1.msra.mxu0 0.0
    %1094 = vmatprep.subr.mxu0 0.0
    %1095 = vmatpush1.msra.mxu0 0.0
    %1096 = vmatprep.subr.mxu0 0.0
    %1097 = vmatpush1.msra.mxu0 0.0
    %1098 = vmatprep.subr.mxu0 0.0
    %1099 = vmatpush1.msra.mxu0 0.0
    %1100 = vmatprep.subr.mxu0 0.0
    %1101 = vmatpush1.msra.mxu0 0.0
    %1102 = vmatprep.subr.mxu0 0.0
    %1103 = vmatpush1.msra.mxu0 0.0
    %1104 = vmatprep.subr.mxu0 0.0
    %1105 = vmatpush1.msra.mxu0 0.0
    %1106 = vmatprep.subr.mxu0 0.0
    %1107 = vmatpush1.msra.mxu0 0.0
    %1108 = vmatprep.subr.mxu0 0.0
    %1109 = vmatpush1.msra.mxu0 %v1060
    %1110 = vmatprep.subr.mxu0 0.0
    %1111 = vmatpush1.msra.mxu0 %v1059
    %1112 = vmatprep.subr.mxu0 0.0
    %1113 = vmatpush1.msra.mxu0 %v1058
    %1114 = vmatprep.subr.mxu0 0.0
    %1115 = vmatpush1.msra.mxu0 %v1057
    %1116 = vmatprep.subr.mxu0 0.0
    %1117 = vmatpush2.msra.mxu0 0.0
    %1118 = vmatprep.subr.mxu0 0.0
    %1119 = vmatpush2.msra.mxu0 0.0
    %1120 = vmatprep.subr.mxu0 0.0
    %1121 = vmatpush2.msra.mxu0 0.0
    %1122 = vmatprep.subr.mxu0 0.0
    %1123 = vmatpush2.msra.mxu0 0.0
    %1124 = vmatprep.subr.mxu0 0.0
    %1125 = vmatpush2.msra.mxu0 0.0
    %1126 = vmatprep.subr.mxu0 0.0
    %1127 = vmatpush2.msra.mxu0 0.0
    %1128 = vmatprep.subr.mxu0 0.0
    %1129 = vmatpush2.msra.mxu0 0.0
    %1130 = vmatprep.subr.mxu0 0.0
    %1131 = vmatpush2.msra.mxu0 0.0
    %1132 = vmatprep.subr.mxu0 0.0
    %1133 = vmatpush2.msra.mxu0 0.0
    %1134 = vmatprep.subr.mxu0 0.0
    %1135 = vmatpush2.msra.mxu0 0.0
    %1136 = vmatprep.subr.mxu0 0.0
    %1137 = vmatpush2.msra.mxu0 0.0
    %1138 = vmatprep.subr.mxu0 0.0
    %1139 = vmatpush2.msra.mxu0 0.0
    %1140 = vmatprep.subr.mxu0 0.0
    %1141 = vmatpush2.msra.mxu0 0.0
    %1142 = vmatprep.subr.mxu0 0.0
    %1143 = vmatpush2.msra.mxu0 0.0
    %1144 = vmatprep.subr.mxu0 0.0
    %1145 = vmatpush2.msra.mxu0 0.0
    %1146 = vmatprep.subr.mxu0 0.0
    %1147 = vmatpush2.msra.mxu0 0.0
    %1148 = vmatprep.mubr.f32.mxu0 0.0
    %1149 = vmatmul.mubr.f32.gmra.mxu0 %v1079
    %v1150 = vpop.f32.mrf.mxu0
    %v1151 = vadd.f32 %v1077, %v1150
    %v1152 = vpop.f32.mrf.mxu0
    %1153 = vmatprep.mubr.f32.mxu0 0.0
    %1154 = vmatmul.mubr.f32.gmra.mxu0 %v1082
    %v1155 = vpop.f32.mrf.mxu0
    %v1156 = vadd.f32 %v1077, %v1155
    %v1157 = vpop.f32.mrf.mxu0
    %1158 = vdwg.mxu0
    %v1159 = vmul.f32 %v1151, %v327
    %v1160 = vmul.f32 %v1156, %v329
    %v1161 = vmul.f32 %v1151, %v331
    %v1162 = vmul.f32 %v1156, %v333
    %v1163 = vmul.f32 %v1151, %v335
    %v1164 = vmul.f32 %v1156, %v337
    %v1165 = vmul.f32 %v1151, %v339
    %v1166 = vmul.f32 %v1156, %v341
    %v1167 = vmul.f32 %v1151, %v359
    %v1168 = vmul.f32 %v1156, %v361
    %v1169 = vmul.f32 %v1151, %v363
    %v1170 = vmul.f32 %v1156, %v365
    %v1171 = vmul.f32 %v1151, %v367
    %v1172 = vmul.f32 %v1156, %v369
    %v1173 = vmul.f32 %v1151, %v371
    %v1174 = vmul.f32 %v1156, %v373
    %1183 = vrot.lane.b32.xlu0 %v1159, 96
    %v1184 = vpop.permute.xlu0 %1183
    %1185 = vrot.lane.b32.xlu0 %v1160, 96
    %v1186 = vpop.permute.xlu0 %1185
    %1187 = vrot.lane.b32.xlu0 %v1161, 96
    %v1188 = vpop.permute.xlu0 %1187
    %1189 = vrot.lane.b32.xlu0 %v1162, 96
    %v1190 = vpop.permute.xlu0 %1189
    %1191 = vrot.lane.b32.xlu0 %v1163, 96
    %v1192 = vpop.permute.xlu0 %1191
    %1193 = vrot.lane.b32.xlu0 %v1164, 96
    %v1194 = vpop.permute.xlu0 %1193
    %1195 = vrot.lane.b32.xlu0 %v1165, 96
    %v1196 = vpop.permute.xlu0 %1195
    %1197 = vrot.lane.b32.xlu0 %v1166, 96
    %v1198 = vpop.permute.xlu0 %1197
    %v1200 = vsel %vm236, %v1151, 0
    %v1203 = vsel %vm236, %v1156, 0
    %v1205 = vsel %vm236, %v1184, 0
    %v1207 = vsel %vm236, %v1186, 0
    %v1209 = vsel %vm236, %v1188, 0
    %v1211 = vsel %vm236, %v1190, 0
    %v1213 = vsel %vm236, %v1192, 0
    %v1215 = vsel %vm236, %v1194, 0
    %v1217 = vsel %vm236, %v1196, 0
    %v1219 = vsel %vm236, %v1198, 0
    %1221 = vmatprep.subr.mxu0 0.0
    %1222 = vmatpush1.xpose.msra.mxu0 0.0
    %1223 = vmatprep.subr.mxu0 0.0
    %1224 = vmatpush1.xpose.msra.mxu0 0.0
    %1225 = vmatprep.subr.mxu0 0.0
    %1226 = vmatpush1.xpose.msra.mxu0 0.0
    %1227 = vmatprep.subr.mxu0 0.0
    %1228 = vmatpush1.xpose.msra.mxu0 0.0
    %1229 = vmatprep.subr.mxu0 0.0
    %1230 = vmatpush1.xpose.msra.mxu0 0.0
    %1231 = vmatprep.subr.mxu0 0.0
    %1232 = vmatpush1.xpose.msra.mxu0 0.0
    %1233 = vmatprep.subr.mxu0 0.0
    %1234 = vmatpush1.xpose.msra.mxu0 0.0
    %1235 = vmatprep.subr.mxu0 0.0
    %1236 = vmatpush1.xpose.msra.mxu0 0.0
    %1237 = vmatprep.subr.mxu0 0.0
    %1238 = vmatpush1.xpose.msra.mxu0 %v1219
    %1239 = vmatprep.subr.mxu0 0.0
    %1240 = vmatpush1.xpose.msra.mxu0 %v1217
    %1241 = vmatprep.subr.mxu0 0.0
    %1242 = vmatpush1.xpose.msra.mxu0 %v1215
    %1243 = vmatprep.subr.mxu0 0.0
    %1244 = vmatpush1.xpose.msra.mxu0 %v1213
    %1245 = vmatprep.subr.mxu0 0.0
    %1246 = vmatpush1.xpose.msra.mxu0 %v1211
    %1247 = vmatprep.subr.mxu0 0.0
    %1248 = vmatpush1.xpose.msra.mxu0 %v1209
    %1249 = vmatprep.subr.mxu0 0.0
    %1250 = vmatpush1.xpose.msra.mxu0 %v1207
    %1251 = vmatprep.subr.mxu0 0.0
    %1252 = vmatpush1.xpose.msra.mxu0 %v1205
    %1253 = vmatprep.subr.mxu0 0.0
    %1254 = vmatpush2.xpose.msra.mxu0 0.0
    %1255 = vmatprep.subr.mxu0 0.0
    %1256 = vmatpush2.xpose.msra.mxu0 0.0
    %1257 = vmatprep.subr.mxu0 0.0
    %1258 = vmatpush2.xpose.msra.mxu0 0.0
    %1259 = vmatprep.subr.mxu0 0.0
    %1260 = vmatpush2.xpose.msra.mxu0 0.0
    %1261 = vmatprep.subr.mxu0 0.0
    %1262 = vmatpush2.xpose.msra.mxu0 0.0
    %1263 = vmatprep.subr.mxu0 0.0
    %1264 = vmatpush2.xpose.msra.mxu0 0.0
    %1265 = vmatprep.subr.mxu0 0.0
    %1266 = vmatpush2.xpose.msra.mxu0 0.0
    %1267 = vmatprep.subr.mxu0 0.0
    %1268 = vmatpush2.xpose.msra.mxu0 0.0
    %1269 = vmatprep.subr.mxu0 0.0
    %1270 = vmatpush2.xpose.msra.mxu0 0.0
    %1271 = vmatprep.subr.mxu0 0.0
    %1272 = vmatpush2.xpose.msra.mxu0 0.0
    %1273 = vmatprep.subr.mxu0 0.0
    %1274 = vmatpush2.xpose.msra.mxu0 0.0
    %1275 = vmatprep.subr.mxu0 0.0
    %1276 = vmatpush2.xpose.msra.mxu0 0.0
    %1277 = vmatprep.subr.mxu0 0.0
    %1278 = vmatpush2.xpose.msra.mxu0 0.0
    %1279 = vmatprep.subr.mxu0 0.0
    %1280 = vmatpush2.xpose.msra.mxu0 0.0
    %1281 = vmatprep.subr.mxu0 0.0
    %1282 = vmatpush2.xpose.msra.mxu0 0.0
    %1283 = vmatprep.subr.mxu0 0.0
    %1284 = vmatpush2.xpose.msra.mxu0 0.0
    %1285 = vmatprep.mubr.f32.mxu0 0.0
    %1286 = vmatmul.mubr.f32.gmra.mxu0 %v1200
    %v1287 = vpop.f32.mrf.mxu0
    %v1288 = vadd.f32 0.0, %v1287
    %v1289 = vpop.f32.mrf.mxu0
    %1290 = vmatprep.mubr.f32.mxu0 0.0
    %1291 = vmatmul.mubr.f32.gmra.mxu0 %v1203
    %v1292 = vpop.f32.mrf.mxu0
    %v1293 = vadd.f32 0.0, %v1292
    %v1294 = vpop.f32.mrf.mxu0
    %1295 = vdwg.mxu0
    %v1296 = vmul.f32 %v1288, 0.35355338
    %v1297 = vmul.f32 %v1293, 0.35355338
    %v1298 = vadd.f32 %v1296, %v149
    %v1299 = vadd.f32 %v1297, %v150
    %v1300 = vsel %vm51, %v1298, -inf
    %1301 = vmax.xlane.f32.xlu0 %v1300
    %v1302 = vpop.xlane.xlu0 %1301
    %v1303 = vsel %vm51, %v1299, -inf
    %1304 = vmax.xlane.f32.xlu0 %v1303
    %v1305 = vpop.xlane.xlu0 %1304
    %v1306 = vsub.f32 %v1298, %v1302
    %v1307 = vsub.f32 %v1299, %v1305
    %v1308 = vmul.f32 %v1306, 1.442695
    %v1309 = vpow.pop %v1308
    %v1310 = vmul.f32 %v1307, 1.442695
    %v1311 = vpow.pop %v1310
    %v1313 = vsel %vm51, %v1309, 0
    %v1316 = vsel %vm51, %v1311, 0
    %1318 = vmatprep.subr.mxu0 0.0
    %1319 = vmatpush1.msra.mxu0 0.0
    %1320 = vmatprep.subr.mxu0 0.0
    %1321 = vmatpush1.msra.mxu0 0.0
    %1322 = vmatprep.subr.mxu0 0.0
    %1323 = vmatpush1.msra.mxu0 0.0
    %1324 = vmatprep.subr.mxu0 0.0
    %1325 = vmatpush1.msra.mxu0 0.0
    %1326 = vmatprep.subr.mxu0 0.0
    %1327 = vmatpush1.msra.mxu0 0.0
    %1328 = vmatprep.subr.mxu0 0.0
    %1329 = vmatpush1.msra.mxu0 0.0
    %1330 = vmatprep.subr.mxu0 0.0
    %1331 = vmatpush1.msra.mxu0 0.0
    %1332 = vmatprep.subr.mxu0 0.0
    %1333 = vmatpush1.msra.mxu0 0.0
    %1334 = vmatprep.subr.mxu0 0.0
    %1335 = vmatpush1.msra.mxu0 %v214
    %1336 = vmatprep.subr.mxu0 0.0
    %1337 = vmatpush1.msra.mxu0 %v213
    %1338 = vmatprep.subr.mxu0 0.0
    %1339 = vmatpush1.msra.mxu0 %v212
    %1340 = vmatprep.subr.mxu0 0.0
    %1341 = vmatpush1.msra.mxu0 %v211
    %1342 = vmatprep.subr.mxu0 0.0
    %1343 = vmatpush1.msra.mxu0 %v210
    %1344 = vmatprep.subr.mxu0 0.0
    %1345 = vmatpush1.msra.mxu0 %v209
    %1346 = vmatprep.subr.mxu0 0.0
    %1347 = vmatpush1.msra.mxu0 %v208
    %1348 = vmatprep.subr.mxu0 0.0
    %1349 = vmatpush1.msra.mxu0 %v207
    %1350 = vmatprep.subr.mxu0 0.0
    %1351 = vmatpush2.msra.mxu0 0.0
    %1352 = vmatprep.subr.mxu0 0.0
    %1353 = vmatpush2.msra.mxu0 0.0
    %1354 = vmatprep.subr.mxu0 0.0
    %1355 = vmatpush2.msra.mxu0 0.0
    %1356 = vmatprep.subr.mxu0 0.0
    %1357 = vmatpush2.msra.mxu0 0.0
    %1358 = vmatprep.subr.mxu0 0.0
    %1359 = vmatpush2.msra.mxu0 0.0
    %1360 = vmatprep.subr.mxu0 0.0
    %1361 = vmatpush2.msra.mxu0 0.0
    %1362 = vmatprep.subr.mxu0 0.0
    %1363 = vmatpush2.msra.mxu0 0.0
    %1364 = vmatprep.subr.mxu0 0.0
    %1365 = vmatpush2.msra.mxu0 0.0
    %1366 = vmatprep.subr.mxu0 0.0
    %1367 = vmatpush2.msra.mxu0 0.0
    %1368 = vmatprep.subr.mxu0 0.0
    %1369 = vmatpush2.msra.mxu0 0.0
    %1370 = vmatprep.subr.mxu0 0.0
    %1371 = vmatpush2.msra.mxu0 0.0
    %1372 = vmatprep.subr.mxu0 0.0
    %1373 = vmatpush2.msra.mxu0 0.0
    %1374 = vmatprep.subr.mxu0 0.0
    %1375 = vmatpush2.msra.mxu0 0.0
    %1376 = vmatprep.subr.mxu0 0.0
    %1377 = vmatpush2.msra.mxu0 0.0
    %1378 = vmatprep.subr.mxu0 0.0
    %1379 = vmatpush2.msra.mxu0 0.0
    %1380 = vmatprep.subr.mxu0 0.0
    %1381 = vmatpush2.msra.mxu0 0.0
    %1382 = vmatprep.mubr.f32.mxu0 0.0
    %1383 = vmatmul.mubr.f32.gmra.mxu0 %v1313
    %v1384 = vpop.f32.mrf.mxu0
    %v1385 = vadd.f32 0.0, %v1384
    %v1386 = vpop.f32.mrf.mxu0
    %1387 = vmatprep.mubr.f32.mxu0 0.0
    %1388 = vmatmul.mubr.f32.gmra.mxu0 %v1316
    %v1389 = vpop.f32.mrf.mxu0
    %v1390 = vadd.f32 0.0, %v1389
    %v1391 = vpop.f32.mrf.mxu0
    %1392 = vdwg.mxu0
    %v1393 = vrcp.pop %v1385
    %v1394 = vrcp.pop %v1390
    %v1395 = vmul.f32 %v1309, %v1393
    %v1396 = vmul.f32 %v1311, %v1394
    %1405 = vrot.lane.b32.xlu0 %v1167, 64
    %v1406 = vpop.permute.xlu0 %1405
    %1407 = vrot.lane.b32.xlu0 %v1168, 64
    %v1408 = vpop.permute.xlu0 %1407
    %1409 = vrot.lane.b32.xlu0 %v1169, 64
    %v1410 = vpop.permute.xlu0 %1409
    %1411 = vrot.lane.b32.xlu0 %v1170, 64
    %v1412 = vpop.permute.xlu0 %1411
    %1413 = vrot.lane.b32.xlu0 %v1171, 64
    %v1414 = vpop.permute.xlu0 %1413
    %1415 = vrot.lane.b32.xlu0 %v1172, 64
    %v1416 = vpop.permute.xlu0 %1415
    %1417 = vrot.lane.b32.xlu0 %v1173, 64
    %v1418 = vpop.permute.xlu0 %1417
    %1419 = vrot.lane.b32.xlu0 %v1174, 64
    %v1420 = vpop.permute.xlu0 %1419
    %v1430 = vsel %vm51, %v1395, 0
    %v1433 = vsel %vm51, %v1396, 0
    %1435 = vmatprep.subr.mxu0 0.0
    %1436 = vmatpush1.msra.mxu0 0.0
    %1437 = vmatprep.subr.mxu0 0.0
    %1438 = vmatpush1.msra.mxu0 0.0
    %1439 = vmatprep.subr.mxu0 0.0
    %1440 = vmatpush1.msra.mxu0 0.0
    %1441 = vmatprep.subr.mxu0 0.0
    %1442 = vmatpush1.msra.mxu0 0.0
    %1443 = vmatprep.subr.mxu0 0.0
    %1444 = vmatpush1.msra.mxu0 0.0
    %1445 = vmatprep.subr.mxu0 0.0
    %1446 = vmatpush1.msra.mxu0 0.0
    %1447 = vmatprep.subr.mxu0 0.0
    %1448 = vmatpush1.msra.mxu0 0.0
    %1449 = vmatprep.subr.mxu0 0.0
    %1450 = vmatpush1.msra.mxu0 0.0
    %1451 = vmatprep.subr.mxu0 0.0
    %1452 = vmatpush1.msra.mxu0 %v1420
    %1453 = vmatprep.subr.mxu0 0.0
    %1454 = vmatpush1.msra.mxu0 %v1418
    %1455 = vmatprep.subr.mxu0 0.0
    %1456 = vmatpush1.msra.mxu0 %v1416
    %1457 = vmatprep.subr.mxu0 0.0
    %1458 = vmatpush1.msra.mxu0 %v1414
    %1459 = vmatprep.subr.mxu0 0.0
    %1460 = vmatpush1.msra.mxu0 %v1412
    %1461 = vmatprep.subr.mxu0 0.0
    %1462 = vmatpush1.msra.mxu0 %v1410
    %1463 = vmatprep.subr.mxu0 0.0
    %1464 = vmatpush1.msra.mxu0 %v1408
    %1465 = vmatprep.subr.mxu0 0.0
    %1466 = vmatpush1.msra.mxu0 %v1406
    %1467 = vmatprep.subr.mxu0 0.0
    %1468 = vmatpush2.msra.mxu0 0.0
    %1469 = vmatprep.subr.mxu0 0.0
    %1470 = vmatpush2.msra.mxu0 0.0
    %1471 = vmatprep.subr.mxu0 0.0
    %1472 = vmatpush2.msra.mxu0 0.0
    %1473 = vmatprep.subr.mxu0 0.0
    %1474 = vmatpush2.msra.mxu0 0.0
    %1475 = vmatprep.subr.mxu0 0.0
    %1476 = vmatpush2.msra.mxu0 0.0
    %1477 = vmatprep.subr.mxu0 0.0
    %1478 = vmatpush2.msra.mxu0 0.0
    %1479 = vmatprep.subr.mxu0 0.0
    %1480 = vmatpush2.msra.mxu0 0.0
    %1481 = vmatprep.subr.mxu0 0.0
    %1482 = vmatpush2.msra.mxu0 0.0
    %1483 = vmatprep.subr.mxu0 0.0
    %1484 = vmatpush2.msra.mxu0 0.0
    %1485 = vmatprep.subr.mxu0 0.0
    %1486 = vmatpush2.msra.mxu0 0.0
    %1487 = vmatprep.subr.mxu0 0.0
    %1488 = vmatpush2.msra.mxu0 0.0
    %1489 = vmatprep.subr.mxu0 0.0
    %1490 = vmatpush2.msra.mxu0 0.0
    %1491 = vmatprep.subr.mxu0 0.0
    %1492 = vmatpush2.msra.mxu0 0.0
    %1493 = vmatprep.subr.mxu0 0.0
    %1494 = vmatpush2.msra.mxu0 0.0
    %1495 = vmatprep.subr.mxu0 0.0
    %1496 = vmatpush2.msra.mxu0 0.0
    %1497 = vmatprep.subr.mxu0 0.0
    %1498 = vmatpush2.msra.mxu0 0.0
    %1499 = vmatprep.mubr.f32.mxu0 0.0
    %1500 = vmatmul.mubr.f32.gmra.mxu0 %v1430
    %v1501 = vpop.f32.mrf.mxu0
    %v1502 = vadd.f32 0.0, %v1501
    %v1503 = vpop.f32.mrf.mxu0
    %1504 = vmatprep.mubr.f32.mxu0 0.0
    %1505 = vmatmul.mubr.f32.gmra.mxu0 %v1433
    %v1506 = vpop.f32.mrf.mxu0
    %v1507 = vadd.f32 0.0, %v1506
    %v1508 = vpop.f32.mrf.mxu0
    %1509 = vdwg.mxu0
    %v1510 = vlaneseq
    %v1511 = vshrl.u32 %v1510, 7
    %v1512 = vsub.s32 1, %v1511
    %v1513 = vrot.slane %v1073, %v1512
    %v1515 = vsel %vm236, %v1502, 0
    %v1518 = vsel %vm236, %v1507, 0
    %1520 = vmatprep.subr.mxu0 0.0
    %1521 = vmatpush1.msra.mxu0 0.0
    %1522 = vmatprep.subr.mxu0 0.0
    %1523 = vmatpush1.msra.mxu0 0.0
    %1524 = vmatprep.subr.mxu0 0.0
    %1525 = vmatpush1.msra.mxu0 0.0
    %1526 = vmatprep.subr.mxu0 0.0
    %1527 = vmatpush1.msra.mxu0 0.0
    %1528 = vmatprep.subr.mxu0 0.0
    %1529 = vmatpush1.msra.mxu0 0.0
    %1530 = vmatprep.subr.mxu0 0.0
    %1531 = vmatpush1.msra.mxu0 0.0
    %1532 = vmatprep.subr.mxu0 0.0
    %1533 = vmatpush1.msra.mxu0 0.0
    %1534 = vmatprep.subr.mxu0 0.0
    %1535 = vmatpush1.msra.mxu0 0.0
    %1536 = vmatprep.subr.mxu0 0.0
    %1537 = vmatpush1.msra.mxu0 0.0
    %1538 = vmatprep.subr.mxu0 0.0
    %1539 = vmatpush1.msra.mxu0 0.0
    %1540 = vmatprep.subr.mxu0 0.0
    %1541 = vmatpush1.msra.mxu0 0.0
    %1542 = vmatprep.subr.mxu0 0.0
    %1543 = vmatpush1.msra.mxu0 0.0
    %1544 = vmatprep.subr.mxu0 0.0
    %1545 = vmatpush1.msra.mxu0 %v1064
    %1546 = vmatprep.subr.mxu0 0.0
    %1547 = vmatpush1.msra.mxu0 %v1063
    %1548 = vmatprep.subr.mxu0 0.0
    %1549 = vmatpush1.msra.mxu0 %v1062
    %1550 = vmatprep.subr.mxu0 0.0
    %1551 = vmatpush1.msra.mxu0 %v1061
    %1552 = vmatprep.subr.mxu0 0.0
    %1553 = vmatpush2.msra.mxu0 0.0
    %1554 = vmatprep.subr.mxu0 0.0
    %1555 = vmatpush2.msra.mxu0 0.0
    %1556 = vmatprep.subr.mxu0 0.0
    %1557 = vmatpush2.msra.mxu0 0.0
    %1558 = vmatprep.subr.mxu0 0.0
    %1559 = vmatpush2.msra.mxu0 0.0
    %1560 = vmatprep.subr.mxu0 0.0
    %1561 = vmatpush2.msra.mxu0 0.0
    %1562 = vmatprep.subr.mxu0 0.0
    %1563 = vmatpush2.msra.mxu0 0.0
    %1564 = vmatprep.subr.mxu0 0.0
    %1565 = vmatpush2.msra.mxu0 0.0
    %1566 = vmatprep.subr.mxu0 0.0
    %1567 = vmatpush2.msra.mxu0 0.0
    %1568 = vmatprep.subr.mxu0 0.0
    %1569 = vmatpush2.msra.mxu0 0.0
    %1570 = vmatprep.subr.mxu0 0.0
    %1571 = vmatpush2.msra.mxu0 0.0
    %1572 = vmatprep.subr.mxu0 0.0
    %1573 = vmatpush2.msra.mxu0 0.0
    %1574 = vmatprep.subr.mxu0 0.0
    %1575 = vmatpush2.msra.mxu0 0.0
    %1576 = vmatprep.subr.mxu0 0.0
    %1577 = vmatpush2.msra.mxu0 0.0
    %1578 = vmatprep.subr.mxu0 0.0
    %1579 = vmatpush2.msra.mxu0 0.0
    %1580 = vmatprep.subr.mxu0 0.0
    %1581 = vmatpush2.msra.mxu0 0.0
    %1582 = vmatprep.subr.mxu0 0.0
    %1583 = vmatpush2.msra.mxu0 0.0
    %1584 = vmatprep.mubr.f32.mxu0 0.0
    %1585 = vmatmul.mubr.f32.gmra.mxu0 %v1515
    %v1586 = vpop.f32.mrf.mxu0
    %v1587 = vadd.f32 %v1513, %v1586
    %v1588 = vpop.f32.mrf.mxu0
    %1589 = vmatprep.mubr.f32.mxu0 0.0
    %1590 = vmatmul.mubr.f32.gmra.mxu0 %v1518
    %v1591 = vpop.f32.mrf.mxu0
    %v1592 = vadd.f32 %v1513, %v1591
    %v1593 = vpop.f32.mrf.mxu0
    %1594 = vdwg.mxu0
    %v1595 = vadd.f32 %v1587, %v1055
    %v1596 = vadd.f32 %v1592, %v1056
    %v1597 = vsel %vm236, %v1595, 0.0
    %1598 = vadd.xlane.f32.xlu0 %v1597
    %v1599 = vpop.xlane.xlu0 %1598
    %v1600 = vsel %vm236, %v1596, 0.0
    %1601 = vadd.xlane.f32.xlu0 %v1600
    %v1602 = vpop.xlane.xlu0 %1601
    %v1603 = vmul.f32 %v1599, %v818
    %v1604 = vmul.f32 %v1602, %v818
    %v1605 = vsub.f32 %v1595, %v1603
    %v1606 = vsub.f32 %v1596, %v1604
    %v1607 = vmul.f32 %v1605, %v1605
    %v1608 = vmul.f32 %v1606, %v1606
    %v1609 = vsel %vm236, %v1607, 0.0
    %1610 = vadd.xlane.f32.xlu0 %v1609
    %v1611 = vpop.xlane.xlu0 %1610
    %v1612 = vsel %vm236, %v1608, 0.0
    %1613 = vadd.xlane.f32.xlu0 %v1612
    %v1614 = vpop.xlane.xlu0 %1613
    %v1615 = vmul.f32 %v1611, %v818
    %v1616 = vmul.f32 %v1614, %v818
    %v1617 = vadd.f32 %v1615, 1e-05
    %v1618 = vadd.f32 %v1616, 1e-05
    %v1619 = vrsqrt.pop %v1617
    %v1620 = vrsqrt.pop %v1618
    %v1621 = vmul.f32 %v1605, %v1619
    %v1622 = vmul.f32 %v1606, %v1620
    %v1623 = vlaneseq
    %v1624 = vshrl.u32 %v1623, 7
    %v1625 = vsub.s32 2, %v1624
    %v1626 = vrot.slane %v1073, %v1625
    %v1627 = vmul.f32 %v1621, %v1626
    %v1628 = vmul.f32 %v1622, %v1626
    %v1629 = vlaneseq
    %v1630 = vshrl.u32 %v1629, 7
    %v1631 = vsub.s32 3, %v1630
    %v1632 = vrot.slane %v1073, %v1631
    %v1633 = vadd.f32 %v1627, %v1632
    %v1634 = vadd.f32 %v1628, %v1632
    %v1635 = vlaneseq
    %v1636 = vshrl.u32 %v1635, 7
    %v1637 = vsub.s32 6, %v1636
    %v1638 = vrot.slane %v1073, %v1637
    %v1640 = vsel %vm236, %v1633, 0
    %v1643 = vsel %vm236, %v1634, 0
    %1645 = vmatprep.subr.mxu0 0.0
    %1646 = vmatpush1.msra.mxu0 0.0
    %1647 = vmatprep.subr.mxu0 0.0
    %1648 = vmatpush1.msra.mxu0 0.0
    %1649 = vmatprep.subr.mxu0 0.0
    %1650 = vmatpush1.msra.mxu0 0.0
    %1651 = vmatprep.subr.mxu0 0.0
    %1652 = vmatpush1.msra.mxu0 0.0
    %1653 = vmatprep.subr.mxu0 0.0
    %1654 = vmatpush1.msra.mxu0 0.0
    %1655 = vmatprep.subr.mxu0 0.0
    %1656 = vmatpush1.msra.mxu0 0.0
    %1657 = vmatprep.subr.mxu0 0.0
    %1658 = vmatpush1.msra.mxu0 0.0
    %1659 = vmatprep.subr.mxu0 0.0
    %1660 = vmatpush1.msra.mxu0 0.0
    %1661 = vmatprep.subr.mxu0 0.0
    %1662 = vmatpush1.msra.mxu0 0.0
    %1663 = vmatprep.subr.mxu0 0.0
    %1664 = vmatpush1.msra.mxu0 0.0
    %1665 = vmatprep.subr.mxu0 0.0
    %1666 = vmatpush1.msra.mxu0 0.0
    %1667 = vmatprep.subr.mxu0 0.0
    %1668 = vmatpush1.msra.mxu0 0.0
    %1669 = vmatprep.subr.mxu0 0.0
    %1670 = vmatpush1.msra.mxu0 %v1068
    %1671 = vmatprep.subr.mxu0 0.0
    %1672 = vmatpush1.msra.mxu0 %v1067
    %1673 = vmatprep.subr.mxu0 0.0
    %1674 = vmatpush1.msra.mxu0 %v1066
    %1675 = vmatprep.subr.mxu0 0.0
    %1676 = vmatpush1.msra.mxu0 %v1065
    %1677 = vmatprep.subr.mxu0 0.0
    %1678 = vmatpush2.msra.mxu0 0.0
    %1679 = vmatprep.subr.mxu0 0.0
    %1680 = vmatpush2.msra.mxu0 0.0
    %1681 = vmatprep.subr.mxu0 0.0
    %1682 = vmatpush2.msra.mxu0 0.0
    %1683 = vmatprep.subr.mxu0 0.0
    %1684 = vmatpush2.msra.mxu0 0.0
    %1685 = vmatprep.subr.mxu0 0.0
    %1686 = vmatpush2.msra.mxu0 0.0
    %1687 = vmatprep.subr.mxu0 0.0
    %1688 = vmatpush2.msra.mxu0 0.0
    %1689 = vmatprep.subr.mxu0 0.0
    %1690 = vmatpush2.msra.mxu0 0.0
    %1691 = vmatprep.subr.mxu0 0.0
    %1692 = vmatpush2.msra.mxu0 0.0
    %1693 = vmatprep.subr.mxu0 0.0
    %1694 = vmatpush2.msra.mxu0 0.0
    %1695 = vmatprep.subr.mxu0 0.0
    %1696 = vmatpush2.msra.mxu0 0.0
    %1697 = vmatprep.subr.mxu0 0.0
    %1698 = vmatpush2.msra.mxu0 0.0
    %1699 = vmatprep.subr.mxu0 0.0
    %1700 = vmatpush2.msra.mxu0 0.0
    %1701 = vmatprep.subr.mxu0 0.0
    %1702 = vmatpush2.msra.mxu0 0.0
    %1703 = vmatprep.subr.mxu0 0.0
    %1704 = vmatpush2.msra.mxu0 0.0
    %1705 = vmatprep.subr.mxu0 0.0
    %1706 = vmatpush2.msra.mxu0 0.0
    %1707 = vmatprep.subr.mxu0 0.0
    %1708 = vmatpush2.msra.mxu0 0.0
    %1709 = vmatprep.mubr.f32.mxu0 0.0
    %1710 = vmatmul.mubr.f32.gmra.mxu0 %v1640
    %v1711 = vpop.f32.mrf.mxu0
    %v1712 = vadd.f32 %v1638, %v1711
    %v1713 = vpop.f32.mrf.mxu0
    %1714 = vmatprep.mubr.f32.mxu0 0.0
    %1715 = vmatmul.mubr.f32.gmra.mxu0 %v1643
    %v1716 = vpop.f32.mrf.mxu0
    %v1717 = vadd.f32 %v1638, %v1716
    %v1718 = vpop.f32.mrf.mxu0
    %1719 = vdwg.mxu0
    %v1720 = vmax.f32 %v1712, 0.0
    %v1721 = vmax.f32 %v1717, 0.0
    %v1722 = vlaneseq
    %v1723 = vshrl.u32 %v1722, 7
    %v1724 = vsub.s32 7, %v1723
    %v1725 = vrot.slane %v1073, %v1724
    %1726 = vmatprep.subr.mxu0 0.0
    %1727 = vmatpush1.xpose.msra.mxu0 0.0
    %1728 = vmatprep.subr.mxu0 0.0
    %1729 = vmatpush1.xpose.msra.mxu0 0.0
    %1730 = vmatprep.subr.mxu0 0.0
    %1731 = vmatpush1.xpose.msra.mxu0 0.0
    %1732 = vmatprep.subr.mxu0 0.0
    %1733 = vmatpush1.xpose.msra.mxu0 0.0
    %1734 = vmatprep.subr.mxu0 0.0
    %1735 = vmatpush1.xpose.msra.mxu0 0.0
    %1736 = vmatprep.subr.mxu0 0.0
    %1737 = vmatpush1.xpose.msra.mxu0 0.0
    %1738 = vmatprep.subr.mxu0 0.0
    %1739 = vmatpush1.xpose.msra.mxu0 0.0
    %1740 = vmatprep.subr.mxu0 0.0
    %1741 = vmatpush1.xpose.msra.mxu0 0.0
    %1742 = vmatprep.subr.mxu0 0.0
    %1743 = vmatpush1.xpose.msra.mxu0 0.0
    %1744 = vmatprep.subr.mxu0 0.0
    %1745 = vmatpush1.xpose.msra.mxu0 0.0
    %1746 = vmatprep.subr.mxu0 0.0
    %1747 = vmatpush1.xpose.msra.mxu0 0.0
    %1748 = vmatprep.subr.mxu0 0.0
    %1749 = vmatpush1.xpose.msra.mxu0 0.0
    %1750 = vmatprep.subr.mxu0 0.0
    %1751 = vmatpush1.xpose.msra.mxu0 %v1072
    %1752 = vmatprep.subr.mxu0 0.0
    %1753 = vmatpush1.xpose.msra.mxu0 %v1071
    %1754 = vmatprep.subr.mxu0 0.0
    %1755 = vmatpush1.xpose.msra.mxu0 %v1070
    %1756 = vmatprep.subr.mxu0 0.0
    %1757 = vmatpush1.xpose.msra.mxu0 %v1069
    %1758 = vmatprep.subr.mxu0 0.0
    %1759 = vmatpush2.xpose.msra.mxu0 0.0
    %1760 = vmatprep.subr.mxu0 0.0
    %1761 = vmatpush2.xpose.msra.mxu0 0.0
    %1762 = vmatprep.subr.mxu0 0.0
    %1763 = vmatpush2.xpose.msra.mxu0 0.0
    %1764 = vmatprep.subr.mxu0 0.0
    %1765 = vmatpush2.xpose.msra.mxu0 0.0
    %1766 = vmatprep.subr.mxu0 0.0
    %1767 = vmatpush2.xpose.msra.mxu0 0.0
    %1768 = vmatprep.subr.mxu0 0.0
    %1769 = vmatpush2.xpose.msra.mxu0 0.0
    %1770 = vmatprep.subr.mxu0 0.0
    %1771 = vmatpush2.xpose.msra.mxu0 0.0
    %1772 = vmatprep.subr.mxu0 0.0
    %1773 = vmatpush2.xpose.msra.mxu0 0.0
    %1774 = vmatprep.subr.mxu0 0.0
    %1775 = vmatpush2.xpose.msra.mxu0 0.0
    %1776 = vmatprep.subr.mxu0 0.0
    %1777 = vmatpush2.xpose.msra.mxu0 0.0
    %1778 = vmatprep.subr.mxu0 0.0
    %1779 = vmatpush2.xpose.msra.mxu0 0.0
    %1780 = vmatprep.subr.mxu0 0.0
    %1781 = vmatpush2.xpose.msra.mxu0 0.0
    %1782 = vmatprep.subr.mxu0 0.0
    %1783 = vmatpush2.xpose.msra.mxu0 0.0
    %1784 = vmatprep.subr.mxu0 0.0
    %1785 = vmatpush2.xpose.msra.mxu0 0.0
    %1786 = vmatprep.subr.mxu0 0.0
    %1787 = vmatpush2.xpose.msra.mxu0 0.0
    %1788 = vmatprep.subr.mxu0 0.0
    %1789 = vmatpush2.xpose.msra.mxu0 0.0
    %1790 = vmatprep.mubr.f32.mxu0 0.0
    %1791 = vmatmul.mubr.f32.gmra.mxu0 %v1720
    %v1792 = vpop.f32.mrf.mxu0
    %v1793 = vadd.f32 %v1725, %v1792
    %v1794 = vpop.f32.mrf.mxu0
    %1795 = vmatprep.mubr.f32.mxu0 0.0
    %1796 = vmatmul.mubr.f32.gmra.mxu0 %v1721
    %v1797 = vpop.f32.mrf.mxu0
    %v1798 = vadd.f32 %v1725, %v1797
    %v1799 = vpop.f32.mrf.mxu0
    %1800 = vdwg.mxu0
    %v1801 = vadd.f32 %v1793, %v1633
    %v1802 = vadd.f32 %v1798, %v1634
    %v1803 = vsel %vm236, %v1801, 0.0
    %1804 = vadd.xlane.f32.xlu0 %v1803
    %v1805 = vpop.xlane.xlu0 %1804
    %v1806 = vsel %vm236, %v1802, 0.0
    %1807 = vadd.xlane.f32.xlu0 %v1806
    %v1808 = vpop.xlane.xlu0 %1807
    %v1809 = vmul.f32 %v1805, %v818
    %v1810 = vmul.f32 %v1808, %v818
    %v1811 = vsub.f32 %v1801, %v1809
    %v1812 = vsub.f32 %v1802, %v1810
    %v1813 = vmul.f32 %v1811, %v1811
    %v1814 = vmul.f32 %v1812, %v1812
    %v1815 = vsel %vm236, %v1813, 0.0
    %1816 = vadd.xlane.f32.xlu0 %v1815
    %v1817 = vpop.xlane.xlu0 %1816
    %v1818 = vsel %vm236, %v1814, 0.0
    %1819 = vadd.xlane.f32.xlu0 %v1818
    %v1820 = vpop.xlane.xlu0 %1819
    %v1821 = vmul.f32 %v1817, %v818
    %v1822 = vmul.f32 %v1820, %v818
    %v1823 = vadd.f32 %v1821, 1e-05
    %v1824 = vadd.f32 %v1822, 1e-05
    %v1825 = vrsqrt.pop %v1823
    %v1826 = vrsqrt.pop %v1824
    %v1827 = vmul.f32 %v1811, %v1825
    %v1828 = vmul.f32 %v1812, %v1826
    %v1829 = vlaneseq
    %v1830 = vshrl.u32 %v1829, 7
    %v1831 = vsub.s32 4, %v1830
    %v1832 = vrot.slane %v1073, %v1831
    %v1833 = vmul.f32 %v1827, %v1832
    %v1834 = vmul.f32 %v1828, %v1832
    %v1835 = vlaneseq
    %v1836 = vshrl.u32 %v1835, 7
    %v1837 = vsub.s32 5, %v1836
    %v1838 = vrot.slane %v1073, %v1837
    %v1839 = vadd.f32 %v1833, %v1838
    %v1840 = vadd.f32 %v1834, %v1838
    %v1841 = vld [vmem:[#allocation2 + $0x50] sm:$0xff]
    %v1842 = vld [vmem:[#allocation2 + $0x58] sm:$0xff]
    %v1843 = vld [vmem:[#allocation2 + $0x60] sm:$0xff]
    %v1844 = vld [vmem:[#allocation2 + $0x68] sm:$0xff]
    %v1845 = vld [vmem:[#allocation2 + $0x70] sm:$0x1]
    %v1846 = vlaneseq
    %v1847 = vshrl.u32 %v1846, 7
    %v1848 = vsub.s32 0, %v1847
    %v1849 = vrot.slane %v1845, %v1848
    %v1851 = vsel %vm236, %v1839, 0
    %v1854 = vsel %vm236, %v1840, 0
    %1856 = vmatprep.subr.mxu0 0.0
    %1857 = vmatpush1.msra.mxu0 0.0
    %1858 = vmatprep.subr.mxu0 0.0
    %1859 = vmatpush1.msra.mxu0 0.0
    %1860 = vmatprep.subr.mxu0 0.0
    %1861 = vmatpush1.msra.mxu0 0.0
    %1862 = vmatprep.subr.mxu0 0.0
    %1863 = vmatpush1.msra.mxu0 0.0
    %1864 = vmatprep.subr.mxu0 0.0
    %1865 = vmatpush1.msra.mxu0 0.0
    %1866 = vmatprep.subr.mxu0 0.0
    %1867 = vmatpush1.msra.mxu0 0.0
    %1868 = vmatprep.subr.mxu0 0.0
    %1869 = vmatpush1.msra.mxu0 0.0
    %1870 = vmatprep.subr.mxu0 0.0
    %1871 = vmatpush1.msra.mxu0 0.0
    %1872 = vmatprep.subr.mxu0 0.0
    %1873 = vmatpush1.msra.mxu0 0.0
    %1874 = vmatprep.subr.mxu0 0.0
    %1875 = vmatpush1.msra.mxu0 0.0
    %1876 = vmatprep.subr.mxu0 0.0
    %1877 = vmatpush1.msra.mxu0 0.0
    %1878 = vmatprep.subr.mxu0 0.0
    %1879 = vmatpush1.msra.mxu0 0.0
    %1880 = vmatprep.subr.mxu0 0.0
    %1881 = vmatpush1.msra.mxu0 %v1844
    %1882 = vmatprep.subr.mxu0 0.0
    %1883 = vmatpush1.msra.mxu0 %v1843
    %1884 = vmatprep.subr.mxu0 0.0
    %1885 = vmatpush1.msra.mxu0 %v1842
    %1886 = vmatprep.subr.mxu0 0.0
    %1887 = vmatpush1.msra.mxu0 %v1841
    %1888 = vmatprep.subr.mxu0 0.0
    %1889 = vmatpush2.msra.mxu0 0.0
    %1890 = vmatprep.subr.mxu0 0.0
    %1891 = vmatpush2.msra.mxu0 0.0
    %1892 = vmatprep.subr.mxu0 0.0
    %1893 = vmatpush2.msra.mxu0 0.0
    %1894 = vmatprep.subr.mxu0 0.0
    %1895 = vmatpush2.msra.mxu0 0.0
    %1896 = vmatprep.subr.mxu0 0.0
    %1897 = vmatpush2.msra.mxu0 0.0
    %1898 = vmatprep.subr.mxu0 0.0
    %1899 = vmatpush2.msra.mxu0 0.0
    %1900 = vmatprep.subr.mxu0 0.0
    %1901 = vmatpush2.msra.mxu0 0.0
    %1902 = vmatprep.subr.mxu0 0.0
    %1903 = vmatpush2.msra.mxu0 0.0
    %1904 = vmatprep.subr.mxu0 0.0
    %1905 = vmatpush2.msra.mxu0 0.0
    %1906 = vmatprep.subr.mxu0 0.0
    %1907 = vmatpush2.msra.mxu0 0.0
    %1908 = vmatprep.subr.mxu0 0.0
    %1909 = vmatpush2.msra.mxu0 0.0
    %1910 = vmatprep.subr.mxu0 0.0
    %1911 = vmatpush2.msra.mxu0 0.0
    %1912 = vmatprep.subr.mxu0 0.0
    %1913 = vmatpush2.msra.mxu0 0.0
    %1914 = vmatprep.subr.mxu0 0.0
    %1915 = vmatpush2.msra.mxu0 0.0
    %1916 = vmatprep.subr.mxu0 0.0
    %1917 = vmatpush2.msra.mxu0 0.0
    %1918 = vmatprep.subr.mxu0 0.0
    %1919 = vmatpush2.msra.mxu0 0.0
    %1920 = vmatprep.mubr.f32.mxu0 0.0
    %1921 = vmatmul.mubr.f32.gmra.mxu0 %v1851
    %v1922 = vpop.f32.mrf.mxu0
    %v1923 = vadd.f32 %v1849, %v1922
    %v1924 = vpop.f32.mrf.mxu0
    %1925 = vmatprep.mubr.f32.mxu0 0.0
    %1926 = vmatmul.mubr.f32.gmra.mxu0 %v1854
    %v1927 = vpop.f32.mrf.mxu0
    %v1928 = vadd.f32 %v1849, %v1927
    %v1929 = vpop.f32.mrf.mxu0
    %1930 = vdwg.mxu0
    %1931 = vst [vmem:[%s2] sm:$0xff] %v1923
    %1932 = vst [vmem:[%s2 + $0x8] sm:$0xff] %v1928
    // Predicated region
    $region14: #{transformer_forward.1} parent=1 // pred_check
      _
    $region15: #{transformer_forward.1} parent=1 // pred_check_branch
      %1934 = sbr.rel (0) target = $region17
    $region16: #{transformer_forward.1} parent=1 // pred_region
      _
    $region17: #{transformer_forward.1} parent=1 // pred_fallthru
      _
    // Predicated region
    $region18: #{transformer_forward.1} parent=1 // pred_check
      _
    $region19: #{transformer_forward.1} parent=1 // pred_check_branch
      %1936 = sbr.rel (0) target = $region21
    $region20: #{transformer_forward.1} parent=1 // pred_region
      _
    $region21: #{transformer_forward.1} parent=1 // pred_fallthru
      _
    %1937 = vsyncpa [#allocation3], 1

</llo_original>
